<compile_context>
chip_gen: v7x
topology: tpu7x:2x2x1
jax: 0.10.0
libtpu: 0.0.40
codegen_flags: <defaults>
</compile_context>

<pallas_src>
import functools

import jax
import jax.numpy as jnp
from jax.experimental import pallas as pl
from jax.experimental.pallas import tpu as pltpu

_VMEM_LIMIT = 48 * 1024 * 1024   # explicit scoped-VMEM budget (ok on v7x's 64MiB)
_MAX_TILE_M = 1024               # rows per grid step for the conv1 matmul
_MAX_TILE_B = 128                # max images per tail grid step
_N_PAD = 128                     # lane-dense padding of the final Q output


def _round_up(x, m):
    return (x + m - 1) // m * m


# ----------------------------------------------------------------------------
# Kernel 1: M-tiled fused  out = relu(x @ w + b)        (conv1 as a matmul)
# ----------------------------------------------------------------------------
def _linear_kernel(x_ref, w_ref, b_ref, o_ref, *, apply_relu):
    acc = jnp.dot(x_ref[...], w_ref[...], preferred_element_type=jnp.float32)
    acc = acc + b_ref[...]                       # (1, N) f32 bias broadcast
    if apply_relu:
        acc = jnp.maximum(acc, 0.0)
    # NOTE: N=32 here means a masked (sub-128-lane) store; acceptable because
    # conv1's HBM traffic is dominated by its patch input, and the conv2/conv3
    # activations (the other narrow stores in v2) no longer leave VMEM at all.
    o_ref[...] = acc.astype(o_ref.dtype)


def pallas_linear_tiled(x, w, b, *, relu, out_dtype, max_tile_m=_MAX_TILE_M):
    """x: (M, K) bf16, w: (K, N) bf16, b: (1, N) f32 -> (M, N) out_dtype."""
    M, K = x.shape
    K2, N = w.shape
    assert K == K2, (K, K2)
    # Tile rule: multiple of 8 rows, >=2 grid steps whenever M allows
    # (dual-TC on v7x), capped at max_tile_m rows.
    if M <= 16:
        tm = _round_up(M, 8)
    else:
        tm = min(max_tile_m, _round_up(_round_up(M, 8) // 2, 8))
    Mp = _round_up(M, tm)
    grid_m = Mp // tm
    xp = x if Mp == M else jnp.pad(x, ((0, Mp - M), (0, 0)))

    out = pl.pallas_call(
        functools.partial(_linear_kernel, apply_relu=relu),
        out_shape=jax.ShapeDtypeStruct((Mp, N), out_dtype),
        grid=(grid_m,),
        in_specs=[
            pl.BlockSpec((tm, K), lambda i: (i, 0)),   # activations: streamed
            pl.BlockSpec((K, N), lambda i: (0, 0)),    # weights: resident
            pl.BlockSpec((1, N), lambda i: (0, 0)),    # bias: resident
        ],
        out_specs=pl.BlockSpec((tm, N), lambda i: (i, 0)),
        compiler_params=pltpu.CompilerParams(
            dimension_semantics=("parallel",),
            vmem_limit_bytes=_VMEM_LIMIT),
    )(xp, w, b)
    return out if Mp == M else out[:M]


# ----------------------------------------------------------------------------
# Kernel 2: fused tail  conv2 -> ReLU -> conv3 -> ReLU -> flatten -> fc1 -> fc2
#
# Input per grid step: one batch tile of the conv1 activations in a
# space-to-depth(2), spatial-major layout A[Y, X, b, (p,q,c)] (128 lanes).
# All conv2/conv3 patch extraction is done with unit-stride slices in VMEM;
# only the final Q (padded to 128 lanes) is written back to HBM.
# ----------------------------------------------------------------------------
def _tail_kernel(a_ref, wc2_ref, bc2_ref, wc3_ref, bc3_ref,
                 wf1_ref, bf1_ref, wf2_ref, bf2_ref,
                 o_ref, a2_scr, h_scr, *, h2, w2, h3, w3):
    tb = a_ref.shape[2]
    s3 = h3 * w3

    # conv2: 4 unit-stride taps, each a (h2*w2*tb, 128) x (128, 64) MXU matmul.
    m2 = h2 * w2 * tb
    acc2 = jnp.zeros((m2, 64), jnp.float32)
    for t in range(4):
        bi, bj = t // 2, t % 2
        xt = a_ref[bi:bi + h2, bj:bj + w2, :, :].reshape(m2, 128)
        acc2 = acc2 + jnp.dot(xt, wc2_ref[t], preferred_element_type=jnp.float32)
    a2 = jnp.maximum(acc2 + bc2_ref[...], 0.0).astype(jnp.bfloat16)
    a2_scr[...] = a2.reshape(h2, w2, tb, 64)          # stays in VMEM

    # conv3: 9 unit-stride taps, (h3*w3*tb, 64) x (64, 64) matmuls.
    m3 = s3 * tb
    acc3 = jnp.zeros((m3, 64), jnp.float32)
    for t in range(9):
        i, j = t // 3, t % 3
        xt = a2_scr[i:i + h3, j:j + w3, :, :].reshape(m3, 64)
        acc3 = acc3 + jnp.dot(xt, wc3_ref[t], preferred_element_type=jnp.float32)
    a3 = jnp.maximum(acc3 + bc3_ref[...], 0.0).astype(jnp.bfloat16)

    # NCHW flatten folded into the fc1 weight re-pack: a3 rows are ordered
    # (spatial, batch), so spatial block s fills columns [s*64, (s+1)*64).
    for s in range(s3):
        h_scr[:, s * 64:(s + 1) * 64] = a3[s * tb:(s + 1) * tb, :]

    # fc1: ONE (tb, s3*64) x (s3*64, 512) matmul (replaces s3 tiny K=64 dots).
    h = jnp.dot(h_scr[...], wf1_ref[...], preferred_element_type=jnp.float32)
    h = jnp.maximum(h + bf1_ref[...], 0.0)

    # fc2 in f32 (tiny head -> parity with the f32 reference); the output is
    # zero-padded to 128 lanes so the store is lane-dense and unmasked.
    q = jnp.dot(h, wf2_ref[...], preferred_element_type=jnp.float32) + bf2_ref[...]
    o_ref[...] = q


def pallas_dqn_tail(A, prep, *, tb, h2, w2, h3, w3):
    n_tiles, h1s, w1s, tb_, lanes = A.shape
    assert tb_ == tb and lanes == 128
    s3 = h3 * w3
    n_pad = prep["wf2"].shape[1]
    kernel = functools.partial(_tail_kernel, h2=h2, w2=w2, h3=h3, w3=w3)
    return pl.pallas_call(
        kernel,
        out_shape=jax.ShapeDtypeStruct((n_tiles * tb, n_pad), jnp.float32),
        grid=(n_tiles,),
        in_specs=[
            # conv1 activations (space-to-depth, spatial-major): streamed.
            pl.BlockSpec((None, h1s, w1s, tb, 128), lambda i: (i, 0, 0, 0, 0)),
            # all weights / biases: resident (constant index_map).
            pl.BlockSpec(prep["wc2"].shape, lambda i: (0, 0, 0)),
            pl.BlockSpec(prep["bc2"].shape, lambda i: (0, 0)),
            pl.BlockSpec(prep["wc3"].shape, lambda i: (0, 0, 0)),
            pl.BlockSpec(prep["bc3"].shape, lambda i: (0, 0)),
            pl.BlockSpec(prep["wf1"].shape, lambda i: (0, 0)),
            pl.BlockSpec(prep["bf1"].shape, lambda i: (0, 0)),
            pl.BlockSpec(prep["wf2"].shape, lambda i: (0, 0)),
            pl.BlockSpec(prep["bf2"].shape, lambda i: (0, 0)),
        ],
        out_specs=pl.BlockSpec((tb, n_pad), lambda i: (i, 0)),
        scratch_shapes=[
            pltpu.VMEM((h2, w2, tb, 64), jnp.bfloat16),   # conv2 activations
            pltpu.VMEM((tb, s3 * 64), jnp.bfloat16),      # flattened fc1 input
        ],
        compiler_params=pltpu.CompilerParams(
            dimension_semantics=("parallel",),
            vmem_limit_bytes=_VMEM_LIMIT),
    )(A, prep["wc2"], prep["bc2"], prep["wc3"], prep["bc3"],
      prep["wf1"], prep["bf1"], prep["wf2"], prep["bf2"])


# ----------------------------------------------------------------------------
# Plain-JAX glue: conv1 im2col (strided slices / stack only, known ordering)
# ----------------------------------------------------------------------------
def _im2col_nhwc(x, k, stride):
    B, H, W, C = x.shape
    Ho = (H - k) // stride + 1
    Wo = (W - k) // stride + 1
    cols = []
    for i in range(k):
        for j in range(k):
            cols.append(x[:, i:i + stride * Ho:stride, j:j + stride * Wo:stride, :])
    p = jnp.stack(cols, axis=3)                       # (B, Ho, Wo, k*k, C)
    return p.reshape(B * Ho * Wo, k * k * C), Ho, Wo


def _choose_batch_tile(batch):
    """Batch padding / tile size for the tail kernel (multiple of 8, >=2 tiles
    when the batch allows so both v7x TensorCores are used, capped at 128)."""
    bp8 = _round_up(batch, 8)
    if bp8 <= 8:
        return bp8, bp8, 1
    tb = min(_MAX_TILE_B, _round_up(bp8 // 2, 8))
    bp = _round_up(bp8, tb)
    return bp, tb, bp // tb


# ----------------------------------------------------------------------------
# One-time weight preparation (all layout plumbing outside the forward pass)
# ----------------------------------------------------------------------------
def prepare_params(params, n_actions, n_pad=_N_PAD):
    # conv1: (O, I, kh, kw) -> (kh*kw*I, O), rows ordered (i, j, c), bf16.
    c1w = params["conv1_w"]
    wc1 = jnp.transpose(c1w, (2, 3, 1, 0)).reshape(-1, c1w.shape[0]).astype(jnp.bfloat16)
    bc1 = params["conv1_b"].reshape(1, -1).astype(jnp.float32)

    # conv2: split the 4x4 taps into 2x2 block offsets (bi, bj) x 2x2 phases
    # (p, q) to match the space-to-depth(2) input layout; rows = p*64+q*32+c.
    c2w = params["conv2_w"]                           # (64, 32, 4, 4) OIHW
    w = jnp.transpose(c2w, (2, 3, 1, 0))              # (i, j, c, o)
    w = w.reshape(2, 2, 2, 2, 32, 64)                 # (bi, p, bj, q, c, o)
    w = jnp.transpose(w, (0, 2, 1, 3, 4, 5))          # (bi, bj, p, q, c, o)
    wc2 = w.reshape(4, 128, 64).astype(jnp.bfloat16)
    bc2 = params["conv2_b"].reshape(1, -1).astype(jnp.float32)

    # conv3: 9 per-tap (c_in, c_out) blocks.
    c3w = params["conv3_w"]                           # (64, 64, 3, 3) OIHW
    wc3 = jnp.transpose(c3w, (2, 3, 1, 0)).reshape(9, 64, 64).astype(jnp.bfloat16)
    bc3 = params["conv3_b"].reshape(1, -1).astype(jnp.float32)

    # fc1: rows reordered from the NCHW-flat index (c*s3 + s) to (s*64 + c).
    conv_out, n_hidden = params["fc1_w"].shape
    s3 = conv_out // 64
    wf1 = params["fc1_w"].reshape(64, s3, n_hidden).transpose(1, 0, 2).reshape(
        s3 * 64, n_hidden).astype(jnp.bfloat16)
    bf1 = params["fc1_b"].reshape(1, -1).astype(jnp.float32)

    # fc2 kept in f32 (tiny head), zero-padded to a lane-dense 128-wide output.
    wf2 = jnp.zeros((n_hidden, n_pad), jnp.float32).at[:, :n_actions].set(
        params["fc2_w"])
    bf2 = jnp.zeros((1, n_pad), jnp.float32).at[0, :n_actions].set(params["fc2_b"])
    return dict(wc1=wc1, bc1=bc1, wc2=wc2, bc2=bc2, wc3=wc3, bc3=bc3,
                wf1=wf1, bf1=bf1, wf2=wf2, bf2=bf2)


# ----------------------------------------------------------------------------
# DQN forward
# ----------------------------------------------------------------------------
def dqn_forward(prep, x_nchw, *, n_actions):
    B = x_nchw.shape[0]
    # NCHW (PyTorch) -> NHWC, bf16 for the MXU.
    x = jnp.transpose(x_nchw, (0, 2, 3, 1)).astype(jnp.bfloat16)

    # conv1: im2col (XLA) + M-tiled fused matmul+bias+ReLU Pallas kernel.
    p1, h1, w1 = _im2col_nhwc(x, 8, 4)
    a1 = pallas_linear_tiled(p1, prep["wc1"], prep["bc1"], relu=True,
                             out_dtype=jnp.bfloat16)

    # Layout glue for the fused tail: pad the batch, space-to-depth(2) and
    # switch to a spatial-major per-tile layout A[tile, Y, X, b, (p,q,c)].
    h2, w2 = (h1 - 4) // 2 + 1, (w1 - 4) // 2 + 1
    h3, w3 = h2 - 2, w2 - 2
    h1s, w1s = h2 + 1, w2 + 1                         # exactly the rows conv2 uses
    Bp, tb, n_tiles = _choose_batch_tile(B)

    a1 = a1.reshape(B, h1, w1, 32)[:, :2 * h1s, :2 * w1s, :]
    if Bp != B:
        a1 = jnp.pad(a1, ((0, Bp - B), (0, 0), (0, 0), (0, 0)))
    A = a1.reshape(n_tiles, tb, h1s, 2, w1s, 2, 32)
    A = A.transpose(0, 2, 4, 1, 3, 5, 6).reshape(n_tiles, h1s, w1s, tb, 128)

    q = pallas_dqn_tail(A, prep, tb=tb, h2=h2, w2=w2, h3=h3, w3=w3)
    return q[:B, :n_actions]


# ----------------------------------------------------------------------------
# Pure-JAX f32 reference (for correctness checking)
# ----------------------------------------------------------------------------
def dqn_forward_ref(params, x_nchw):
    x = x_nchw.astype(jnp.float32)

    def conv(x, w, b, s):
        y = jax.lax.conv_general_dilated(
            x, w, window_strides=(s, s), padding="VALID",
            dimension_numbers=("NCHW", "OIHW", "NCHW"))
        return jnp.maximum(y + b[None, :, None, None], 0.0)

    x = conv(x, params["conv1_w"], params["conv1_b"], 4)
    x = conv(x, params["conv2_w"], params["conv2_b"], 2)
    x = conv(x, params["conv3_w"], params["conv3_b"], 1)
    flat = x.reshape(x.shape[0], -1)
    h = jnp.maximum(flat @ params["fc1_w"] + params["fc1_b"], 0.0)
    return h @ params["fc2_w"] + params["fc2_b"]


# ----------------------------------------------------------------------------
# Deterministic parameter init (shapes from DQN.__init__)
# ----------------------------------------------------------------------------
def init_params(key, in_channels, spatial, n_actions):
    h1 = (spatial - 8) // 4 + 1
    h2 = (h1 - 4) // 2 + 1
    h3 = (h2 - 3) // 1 + 1
    conv_out_size = 64 * h3 * h3

    ks = jax.random.split(key, 10)
    scale = 0.05
    return {
        "conv1_w": scale * jax.random.normal(ks[0], (32, in_channels, 8, 8), jnp.float32),
        "conv1_b": scale * jax.random.normal(ks[1], (32,), jnp.float32),
        "conv2_w": scale * jax.random.normal(ks[2], (64, 32, 4, 4), jnp.float32),
        "conv2_b": scale * jax.random.normal(ks[3], (64,), jnp.float32),
        "conv3_w": scale * jax.random.normal(ks[4], (64, 64, 3, 3), jnp.float32),
        "conv3_b": scale * jax.random.normal(ks[5], (64,), jnp.float32),
        "fc1_w": scale * jax.random.normal(ks[6], (conv_out_size, 512), jnp.float32),
        "fc1_b": scale * jax.random.normal(ks[7], (512,), jnp.float32),
        "fc2_w": scale * jax.random.normal(ks[8], (512, n_actions), jnp.float32),
        "fc2_b": scale * jax.random.normal(ks[9], (n_actions,), jnp.float32),
    }


if __name__ == "__main__":
    # Smallest conv-valid input: batch=2, channels=4, spatial=36x36
    # (36 -> 8 -> 3 -> 1 through the 8/4/3 conv stack; conv_out_size = 64).
    B, C, S = 2, 4, 36
    N_ACTIONS = 2

    key = jax.random.PRNGKey(0)
    k_x, k_p = jax.random.split(key)
    x = jax.random.normal(k_x, (B, C, S, S), jnp.float32)
    params = init_params(k_p, C, S, N_ACTIONS)
    prep = prepare_params(params, N_ACTIONS)

    fwd = jax.jit(functools.partial(dqn_forward, n_actions=N_ACTIONS))
    q = jax.block_until_ready(fwd(prep, x))
    assert q.shape == (B, N_ACTIONS), q.shape

    q_ref = dqn_forward_ref(params, x)
    # bf16 MXU inputs for the conv/fc1 layers -> looser tolerance vs f32 ref.
    if not jnp.allclose(q, q_ref, atol=3e-2, rtol=3e-2):
        max_err = float(jnp.max(jnp.abs(q - q_ref)))
        raise AssertionError(
            f"Pallas DQN output mismatch vs JAX reference (max_err={max_err})")
    print("KERNEL_OK")
</pallas_src>

<mosaic_0001>
module attributes {stable_mosaic.version = 11 : i64} {
  func.func @_linear_kernel(%arg0: i32, %arg1: memref<64x256xbf16, #tpu.memory_space<vmem>>, %arg2: memref<256x32xbf16, #tpu.memory_space<vmem>>, %arg3: memref<1x32xf32, #tpu.memory_space<vmem>>, %arg4: memref<64x32xbf16, #tpu.memory_space<vmem>>) attributes {dimension_semantics = [#tpu.dimension_semantics<parallel>], iteration_bounds = array<i64: 2>, scalar_prefetch = 0 : i64, scratch_operands = 0 : i64, tpu.core_type = #tpu.core_type<tc>, window_params = [{transform_indices = @transform_0, window_bounds = array<i64: 64, 256>}, {pipeline_mode = #tpu.pipeline_mode<synchronous>, transform_indices = @transform_1, window_bounds = array<i64: 256, 32>}, {pipeline_mode = #tpu.pipeline_mode<synchronous>, transform_indices = @transform_2, window_bounds = array<i64: 1, 32>}, {transform_indices = @transform_3, window_bounds = array<i64: 64, 32>}]} {
    %c0 = arith.constant 0 : index
    %c0_0 = arith.constant 0 : index
    %0 = vector.load %arg1[%c0, %c0_0] : memref<64x256xbf16, #tpu.memory_space<vmem>>, vector<64x256xbf16>
    %c0_1 = arith.constant 0 : index
    %c0_2 = arith.constant 0 : index
    %1 = vector.load %arg2[%c0_1, %c0_2] : memref<256x32xbf16, #tpu.memory_space<vmem>>, vector<256x32xbf16>
    %cst = arith.constant dense<0.000000e+00> : vector<64x32xf32>
    %2 = tpu.matmul %0, %1, %cst {dimension_numbers = #tpu.dot_dimension_numbers<[1], [0], [0], [1], [0, 0, 1, 1], [], []>} : vector<64x256xbf16>, vector<256x32xbf16>, vector<64x32xf32> -> vector<64x32xf32>
    %c0_3 = arith.constant 0 : index
    %c0_4 = arith.constant 0 : index
    %3 = vector.load %arg3[%c0_3, %c0_4] : memref<1x32xf32, #tpu.memory_space<vmem>>, vector<1x32xf32>
    %4 = vector.broadcast %3 : vector<1x32xf32> to vector<64x32xf32>
    %5 = arith.addf %2, %4 : vector<64x32xf32>
    %cst_5 = arith.constant 0.000000e+00 : f32
    %6 = vector.broadcast %cst_5 : f32 to vector<64x32xf32>
    %7 = arith.maximumf %5, %6 : vector<64x32xf32>
    %8 = arith.truncf %7 : vector<64x32xf32> to vector<64x32xbf16>
    %c0_6 = arith.constant 0 : index
    %c0_7 = arith.constant 0 : index
    %9 = vector.load %arg4[%c0_6, %c0_7] : memref<64x32xbf16, #tpu.memory_space<vmem>>, vector<64x32xbf16>
    tpu.vector_store %arg4[%c0_6, %c0_7], %8 {strides = array<i32>} : memref<64x32xbf16, #tpu.memory_space<vmem>>, vector<64x32xbf16>,
    return
  }
  func.func @transform_0(%arg0: i32) -> (i32, i32) {
    %c0_i32 = arith.constant 0 : i32
    %c0_i32_0 = arith.constant 0 : i32
    return %arg0, %c0_i32 : i32, i32
  }
  func.func @transform_1(%arg0: i32) -> (i32, i32) {
    %c0_i32 = arith.constant 0 : i32
    %c0_i32_0 = arith.constant 0 : i32
    %c0_i32_1 = arith.constant 0 : i32
    return %c0_i32, %c0_i32_0 : i32, i32
  }
  func.func @transform_2(%arg0: i32) -> (i32, i32) {
    %c0_i32 = arith.constant 0 : i32
    %c0_i32_0 = arith.constant 0 : i32
    %c0_i32_1 = arith.constant 0 : i32
    return %c0_i32, %c0_i32_0 : i32, i32
  }
  func.func @transform_3(%arg0: i32) -> (i32, i32) {
    %c0_i32 = arith.constant 0 : i32
    %c0_i32_0 = arith.constant 0 : i32
    return %arg0, %c0_i32 : i32, i32
  }
}

module attributes {stable_mosaic.version = 11 : i64} {
  func.func @_tail_kernel(%arg0: i32, %arg1: memref<1x4x4x8x128xbf16, #tpu.memory_space<vmem>>, %arg2: memref<4x128x64xbf16, #tpu.memory_space<vmem>>, %arg3: memref<1x64xf32, #tpu.memory_space<vmem>>, %arg4: memref<9x64x64xbf16, #tpu.memory_space<vmem>>, %arg5: memref<1x64xf32, #tpu.memory_space<vmem>>, %arg6: memref<64x512xbf16, #tpu.memory_space<vmem>>, %arg7: memref<1x512xf32, #tpu.memory_space<vmem>>, %arg8: memref<512x128xf32, #tpu.memory_space<vmem>>, %arg9: memref<1x128xf32, #tpu.memory_space<vmem>>, %arg10: memref<8x128xf32, #tpu.memory_space<vmem>>, %arg11: memref<3x3x8x64xbf16, #tpu.memory_space<vmem>>, %arg12: memref<8x64xbf16, #tpu.memory_space<vmem>>) attributes {dimension_semantics = [#tpu.dimension_semantics<parallel>], iteration_bounds = array<i64: 1>, scalar_prefetch = 0 : i64, scratch_operands = 2 : i64, tpu.core_type = #tpu.core_type<tc>, window_params = [{transform_indices = @transform_0, window_bounds = array<i64: 1, 4, 4, 8, 128>}, {pipeline_mode = #tpu.pipeline_mode<synchronous>, transform_indices = @transform_1, window_bounds = array<i64: 4, 128, 64>}, {pipeline_mode = #tpu.pipeline_mode<synchronous>, transform_indices = @transform_2, window_bounds = array<i64: 1, 64>}, {pipeline_mode = #tpu.pipeline_mode<synchronous>, transform_indices = @transform_3, window_bounds = array<i64: 9, 64, 64>}, {pipeline_mode = #tpu.pipeline_mode<synchronous>, transform_indices = @transform_4, window_bounds = array<i64: 1, 64>}, {pipeline_mode = #tpu.pipeline_mode<synchronous>, transform_indices = @transform_5, window_bounds = array<i64: 64, 512>}, {pipeline_mode = #tpu.pipeline_mode<synchronous>, transform_indices = @transform_6, window_bounds = array<i64: 1, 512>}, {pipeline_mode = #tpu.pipeline_mode<synchronous>, transform_indices = @transform_7, window_bounds = array<i64: 512, 128>}, {pipeline_mode = #tpu.pipeline_mode<synchronous>, transform_indices = @transform_8, window_bounds = array<i64: 1, 128>}, {transform_indices = @transform_9, window_bounds = array<i64: 8, 128>}]} {
    %cst = arith.constant 0.000000e+00 : f32
    %0 = vector.broadcast %cst : f32 to vector<72x64xf32>
    %c0 = arith.constant 0 : index
    %c0_0 = arith.constant 0 : index
    %c0_1 = arith.constant 0 : index
    %c0_2 = arith.constant 0 : index
    %c0_3 = arith.constant 0 : index
    %1 = vector.load %arg1[%c0, %c0_0, %c0_1, %c0_2, %c0_3] : memref<1x4x4x8x128xbf16, #tpu.memory_space<vmem>>, vector<1x3x3x8x128xbf16>
    %2 = vector.shape_cast %1 : vector<1x3x3x8x128xbf16> to vector<3x3x8x128xbf16>
    %3 = vector.shape_cast %2 : vector<3x3x8x128xbf16> to vector<72x128xbf16>
    %c0_4 = arith.constant 0 : index
    %c0_5 = arith.constant 0 : index
    %c0_6 = arith.constant 0 : index
    %4 = vector.load %arg2[%c0_4, %c0_5, %c0_6] : memref<4x128x64xbf16, #tpu.memory_space<vmem>>, vector<1x128x64xbf16>
    %5 = vector.shape_cast %4 : vector<1x128x64xbf16> to vector<128x64xbf16>
    %cst_7 = arith.constant dense<0.000000e+00> : vector<72x64xf32>
    %6 = tpu.matmul %3, %5, %cst_7 {dimension_numbers = #tpu.dot_dimension_numbers<[1], [0], [0], [1], [0, 0, 1, 1], [], []>} : vector<72x128xbf16>, vector<128x64xbf16>, vector<72x64xf32> -> vector<72x64xf32>
    %7 = arith.addf %0, %6 : vector<72x64xf32>
    %c0_8 = arith.constant 0 : index
    %c0_9 = arith.constant 0 : index
    %c1 = arith.constant 1 : index
    %c0_10 = arith.constant 0 : index
    %c0_11 = arith.constant 0 : index
    %8 = vector.load %arg1[%c0_8, %c0_9, %c1, %c0_10, %c0_11] : memref<1x4x4x8x128xbf16, #tpu.memory_space<vmem>>, vector<1x3x3x8x128xbf16>
    %9 = vector.shape_cast %8 : vector<1x3x3x8x128xbf16> to vector<3x3x8x128xbf16>
    %10 = vector.shape_cast %9 : vector<3x3x8x128xbf16> to vector<72x128xbf16>
    %c1_12 = arith.constant 1 : index
    %c0_13 = arith.constant 0 : index
    %c0_14 = arith.constant 0 : index
    %11 = vector.load %arg2[%c1_12, %c0_13, %c0_14] : memref<4x128x64xbf16, #tpu.memory_space<vmem>>, vector<1x128x64xbf16>
    %12 = vector.shape_cast %11 : vector<1x128x64xbf16> to vector<128x64xbf16>
    %cst_15 = arith.constant dense<0.000000e+00> : vector<72x64xf32>
    %13 = tpu.matmul %10, %12, %cst_15 {dimension_numbers = #tpu.dot_dimension_numbers<[1], [0], [0], [1], [0, 0, 1, 1], [], []>} : vector<72x128xbf16>, vector<128x64xbf16>, vector<72x64xf32> -> vector<72x64xf32>
    %14 = arith.addf %7, %13 : vector<72x64xf32>
    %c0_16 = arith.constant 0 : index
    %c1_17 = arith.constant 1 : index
    %c0_18 = arith.constant 0 : index
    %c0_19 = arith.constant 0 : index
    %c0_20 = arith.constant 0 : index
    %15 = vector.load %arg1[%c0_16, %c1_17, %c0_18, %c0_19, %c0_20] : memref<1x4x4x8x128xbf16, #tpu.memory_space<vmem>>, vector<1x3x3x8x128xbf16>
    %16 = vector.shape_cast %15 : vector<1x3x3x8x128xbf16> to vector<3x3x8x128xbf16>
    %17 = vector.shape_cast %16 : vector<3x3x8x128xbf16> to vector<72x128xbf16>
    %c2 = arith.constant 2 : index
    %c0_21 = arith.constant 0 : index
    %c0_22 = arith.constant 0 : index
    %18 = vector.load %arg2[%c2, %c0_21, %c0_22] : memref<4x128x64xbf16, #tpu.memory_space<vmem>>, vector<1x128x64xbf16>
    %19 = vector.shape_cast %18 : vector<1x128x64xbf16> to vector<128x64xbf16>
    %cst_23 = arith.constant dense<0.000000e+00> : vector<72x64xf32>
    %20 = tpu.matmul %17, %19, %cst_23 {dimension_numbers = #tpu.dot_dimension_numbers<[1], [0], [0], [1], [0, 0, 1, 1], [], []>} : vector<72x128xbf16>, vector<128x64xbf16>, vector<72x64xf32> -> vector<72x64xf32>
    %21 = arith.addf %14, %20 : vector<72x64xf32>
    %c0_24 = arith.constant 0 : index
    %c1_25 = arith.constant 1 : index
    %c1_26 = arith.constant 1 : index
    %c0_27 = arith.constant 0 : index
    %c0_28 = arith.constant 0 : index
    %22 = vector.load %arg1[%c0_24, %c1_25, %c1_26, %c0_27, %c0_28] : memref<1x4x4x8x128xbf16, #tpu.memory_space<vmem>>, vector<1x3x3x8x128xbf16>
    %23 = vector.shape_cast %22 : vector<1x3x3x8x128xbf16> to vector<3x3x8x128xbf16>
    %24 = vector.shape_cast %23 : vector<3x3x8x128xbf16> to vector<72x128xbf16>
    %c3 = arith.constant 3 : index
    %c0_29 = arith.constant 0 : index
    %c0_30 = arith.constant 0 : index
    %25 = vector.load %arg2[%c3, %c0_29, %c0_30] : memref<4x128x64xbf16, #tpu.memory_space<vmem>>, vector<1x128x64xbf16>
    %26 = vector.shape_cast %25 : vector<1x128x64xbf16> to vector<128x64xbf16>
    %cst_31 = arith.constant dense<0.000000e+00> : vector<72x64xf32>
    %27 = tpu.matmul %24, %26, %cst_31 {dimension_numbers = #tpu.dot_dimension_numbers<[1], [0], [0], [1], [0, 0, 1, 1], [], []>} : vector<72x128xbf16>, vector<128x64xbf16>, vector<72x64xf32> -> vector<72x64xf32>
    %28 = arith.addf %21, %27 : vector<72x64xf32>
    %c0_32 = arith.constant 0 : index
    %c0_33 = arith.constant 0 : index
    %29 = vector.load %arg3[%c0_32, %c0_33] : memref<1x64xf32, #tpu.memory_space<vmem>>, vector<1x64xf32>
    %30 = vector.broadcast %29 : vector<1x64xf32> to vector<72x64xf32>
    %31 = arith.addf %28, %30 : vector<72x64xf32>
    %cst_34 = arith.constant 0.000000e+00 : f32
    %32 = vector.broadcast %cst_34 : f32 to vector<72x64xf32>
    %33 = arith.maximumf %31, %32 : vector<72x64xf32>
    %34 = arith.truncf %33 : vector<72x64xf32> to vector<72x64xbf16>
    %35 = vector.shape_cast %34 : vector<72x64xbf16> to vector<3x3x8x64xbf16>
    %c0_35 = arith.constant 0 : index
    %c0_36 = arith.constant 0 : index
    %c0_37 = arith.constant 0 : index
    %c0_38 = arith.constant 0 : index
    %36 = vector.load %arg11[%c0_35, %c0_36, %c0_37, %c0_38] : memref<3x3x8x64xbf16, #tpu.memory_space<vmem>>, vector<3x3x8x64xbf16>
    tpu.vector_store %arg11[%c0_35, %c0_36, %c0_37, %c0_38], %35 {strides = array<i32>} : memref<3x3x8x64xbf16, #tpu.memory_space<vmem>>, vector<3x3x8x64xbf16>,
    %cst_39 = arith.constant 0.000000e+00 : f32
    %37 = vector.broadcast %cst_39 : f32 to vector<8x64xf32>
    %c0_40 = arith.constant 0 : index
    %c0_41 = arith.constant 0 : index
    %c0_42 = arith.constant 0 : index
    %c0_43 = arith.constant 0 : index
    %38 = vector.load %arg11[%c0_40, %c0_41, %c0_42, %c0_43] : memref<3x3x8x64xbf16, #tpu.memory_space<vmem>>, vector<1x1x8x64xbf16>
    %39 = vector.shape_cast %38 : vector<1x1x8x64xbf16> to vector<8x64xbf16>
    %c0_44 = arith.constant 0 : index
    %c0_45 = arith.constant 0 : index
    %c0_46 = arith.constant 0 : index
    %40 = vector.load %arg4[%c0_44, %c0_45, %c0_46] : memref<9x64x64xbf16, #tpu.memory_space<vmem>>, vector<1x64x64xbf16>
    %41 = vector.shape_cast %40 : vector<1x64x64xbf16> to vector<64x64xbf16>
    %cst_47 = arith.constant dense<0.000000e+00> : vector<8x64xf32>
    %42 = tpu.matmul %39, %41, %cst_47 {dimension_numbers = #tpu.dot_dimension_numbers<[1], [0], [0], [1], [0, 0, 1, 1], [], []>} : vector<8x64xbf16>, vector<64x64xbf16>, vector<8x64xf32> -> vector<8x64xf32>
    %43 = arith.addf %37, %42 : vector<8x64xf32>
    %c0_48 = arith.constant 0 : index
    %c1_49 = arith.constant 1 : index
    %c0_50 = arith.constant 0 : index
    %c0_51 = arith.constant 0 : index
    %44 = vector.load %arg11[%c0_48, %c1_49, %c0_50, %c0_51] : memref<3x3x8x64xbf16, #tpu.memory_space<vmem>>, vector<1x1x8x64xbf16>
    %45 = vector.shape_cast %44 : vector<1x1x8x64xbf16> to vector<8x64xbf16>
    %c1_52 = arith.constant 1 : index
    %c0_53 = arith.constant 0 : index
    %c0_54 = arith.constant 0 : index
    %46 = vector.load %arg4[%c1_52, %c0_53, %c0_54] : memref<9x64x64xbf16, #tpu.memory_space<vmem>>, vector<1x64x64xbf16>
    %47 = vector.shape_cast %46 : vector<1x64x64xbf16> to vector<64x64xbf16>
    %cst_55 = arith.constant dense<0.000000e+00> : vector<8x64xf32>
    %48 = tpu.matmul %45, %47, %cst_55 {dimension_numbers = #tpu.dot_dimension_numbers<[1], [0], [0], [1], [0, 0, 1, 1], [], []>} : vector<8x64xbf16>, vector<64x64xbf16>, vector<8x64xf32> -> vector<8x64xf32>
    %49 = arith.addf %43, %48 : vector<8x64xf32>
    %c0_56 = arith.constant 0 : index
    %c2_57 = arith.constant 2 : index
    %c0_58 = arith.constant 0 : index
    %c0_59 = arith.constant 0 : index
    %50 = vector.load %arg11[%c0_56, %c2_57, %c0_58, %c0_59] : memref<3x3x8x64xbf16, #tpu.memory_space<vmem>>, vector<1x1x8x64xbf16>
    %51 = vector.shape_cast %50 : vector<1x1x8x64xbf16> to vector<8x64xbf16>
    %c2_60 = arith.constant 2 : index
    %c0_61 = arith.constant 0 : index
    %c0_62 = arith.constant 0 : index
    %52 = vector.load %arg4[%c2_60, %c0_61, %c0_62] : memref<9x64x64xbf16, #tpu.memory_space<vmem>>, vector<1x64x64xbf16>
    %53 = vector.shape_cast %52 : vector<1x64x64xbf16> to vector<64x64xbf16>
    %cst_63 = arith.constant dense<0.000000e+00> : vector<8x64xf32>
    %54 = tpu.matmul %51, %53, %cst_63 {dimension_numbers = #tpu.dot_dimension_numbers<[1], [0], [0], [1], [0, 0, 1, 1], [], []>} : vector<8x64xbf16>, vector<64x64xbf16>, vector<8x64xf32> -> vector<8x64xf32>
    %55 = arith.addf %49, %54 : vector<8x64xf32>
    %c1_64 = arith.constant 1 : index
    %c0_65 = arith.constant 0 : index
    %c0_66 = arith.constant 0 : index
    %c0_67 = arith.constant 0 : index
    %56 = vector.load %arg11[%c1_64, %c0_65, %c0_66, %c0_67] : memref<3x3x8x64xbf16, #tpu.memory_space<vmem>>, vector<1x1x8x64xbf16>
    %57 = vector.shape_cast %56 : vector<1x1x8x64xbf16> to vector<8x64xbf16>
    %c3_68 = arith.constant 3 : index
    %c0_69 = arith.constant 0 : index
    %c0_70 = arith.constant 0 : index
    %58 = vector.load %arg4[%c3_68, %c0_69, %c0_70] : memref<9x64x64xbf16, #tpu.memory_space<vmem>>, vector<1x64x64xbf16>
    %59 = vector.shape_cast %58 : vector<1x64x64xbf16> to vector<64x64xbf16>
    %cst_71 = arith.constant dense<0.000000e+00> : vector<8x64xf32>
    %60 = tpu.matmul %57, %59, %cst_71 {dimension_numbers = #tpu.dot_dimension_numbers<[1], [0], [0], [1], [0, 0, 1, 1], [], []>} : vector<8x64xbf16>, vector<64x64xbf16>, vector<8x64xf32> -> vector<8x64xf32>
    %61 = arith.addf %55, %60 : vector<8x64xf32>
    %c1_72 = arith.constant 1 : index
    %c1_73 = arith.constant 1 : index
    %c0_74 = arith.constant 0 : index
    %c0_75 = arith.constant 0 : index
    %62 = vector.load %arg11[%c1_72, %c1_73, %c0_74, %c0_75] : memref<3x3x8x64xbf16, #tpu.memory_space<vmem>>, vector<1x1x8x64xbf16>
    %63 = vector.shape_cast %62 : vector<1x1x8x64xbf16> to vector<8x64xbf16>
    %c4 = arith.constant 4 : index
    %c0_76 = arith.constant 0 : index
    %c0_77 = arith.constant 0 : index
    %64 = vector.load %arg4[%c4, %c0_76, %c0_77] : memref<9x64x64xbf16, #tpu.memory_space<vmem>>, vector<1x64x64xbf16>
    %65 = vector.shape_cast %64 : vector<1x64x64xbf16> to vector<64x64xbf16>
    %cst_78 = arith.constant dense<0.000000e+00> : vector<8x64xf32>
    %66 = tpu.matmul %63, %65, %cst_78 {dimension_numbers = #tpu.dot_dimension_numbers<[1], [0], [0], [1], [0, 0, 1, 1], [], []>} : vector<8x64xbf16>, vector<64x64xbf16>, vector<8x64xf32> -> vector<8x64xf32>
    %67 = arith.addf %61, %66 : vector<8x64xf32>
    %c1_79 = arith.constant 1 : index
    %c2_80 = arith.constant 2 : index
    %c0_81 = arith.constant 0 : index
    %c0_82 = arith.constant 0 : index
    %68 = vector.load %arg11[%c1_79, %c2_80, %c0_81, %c0_82] : memref<3x3x8x64xbf16, #tpu.memory_space<vmem>>, vector<1x1x8x64xbf16>
    %69 = vector.shape_cast %68 : vector<1x1x8x64xbf16> to vector<8x64xbf16>
    %c5 = arith.constant 5 : index
    %c0_83 = arith.constant 0 : index
    %c0_84 = arith.constant 0 : index
    %70 = vector.load %arg4[%c5, %c0_83, %c0_84] : memref<9x64x64xbf16, #tpu.memory_space<vmem>>, vector<1x64x64xbf16>
    %71 = vector.shape_cast %70 : vector<1x64x64xbf16> to vector<64x64xbf16>
    %cst_85 = arith.constant dense<0.000000e+00> : vector<8x64xf32>
    %72 = tpu.matmul %69, %71, %cst_85 {dimension_numbers = #tpu.dot_dimension_numbers<[1], [0], [0], [1], [0, 0, 1, 1], [], []>} : vector<8x64xbf16>, vector<64x64xbf16>, vector<8x64xf32> -> vector<8x64xf32>
    %73 = arith.addf %67, %72 : vector<8x64xf32>
    %c2_86 = arith.constant 2 : index
    %c0_87 = arith.constant 0 : index
    %c0_88 = arith.constant 0 : index
    %c0_89 = arith.constant 0 : index
    %74 = vector.load %arg11[%c2_86, %c0_87, %c0_88, %c0_89] : memref<3x3x8x64xbf16, #tpu.memory_space<vmem>>, vector<1x1x8x64xbf16>
    %75 = vector.shape_cast %74 : vector<1x1x8x64xbf16> to vector<8x64xbf16>
    %c6 = arith.constant 6 : index
    %c0_90 = arith.constant 0 : index
    %c0_91 = arith.constant 0 : index
    %76 = vector.load %arg4[%c6, %c0_90, %c0_91] : memref<9x64x64xbf16, #tpu.memory_space<vmem>>, vector<1x64x64xbf16>
    %77 = vector.shape_cast %76 : vector<1x64x64xbf16> to vector<64x64xbf16>
    %cst_92 = arith.constant dense<0.000000e+00> : vector<8x64xf32>
    %78 = tpu.matmul %75, %77, %cst_92 {dimension_numbers = #tpu.dot_dimension_numbers<[1], [0], [0], [1], [0, 0, 1, 1], [], []>} : vector<8x64xbf16>, vector<64x64xbf16>, vector<8x64xf32> -> vector<8x64xf32>
    %79 = arith.addf %73, %78 : vector<8x64xf32>
    %c2_93 = arith.constant 2 : index
    %c1_94 = arith.constant 1 : index
    %c0_95 = arith.constant 0 : index
    %c0_96 = arith.constant 0 : index
    %80 = vector.load %arg11[%c2_93, %c1_94, %c0_95, %c0_96] : memref<3x3x8x64xbf16, #tpu.memory_space<vmem>>, vector<1x1x8x64xbf16>
    %81 = vector.shape_cast %80 : vector<1x1x8x64xbf16> to vector<8x64xbf16>
    %c7 = arith.constant 7 : index
    %c0_97 = arith.constant 0 : index
    %c0_98 = arith.constant 0 : index
    %82 = vector.load %arg4[%c7, %c0_97, %c0_98] : memref<9x64x64xbf16, #tpu.memory_space<vmem>>, vector<1x64x64xbf16>
    %83 = vector.shape_cast %82 : vector<1x64x64xbf16> to vector<64x64xbf16>
    %cst_99 = arith.constant dense<0.000000e+00> : vector<8x64xf32>
    %84 = tpu.matmul %81, %83, %cst_99 {dimension_numbers = #tpu.dot_dimension_numbers<[1], [0], [0], [1], [0, 0, 1, 1], [], []>} : vector<8x64xbf16>, vector<64x64xbf16>, vector<8x64xf32> -> vector<8x64xf32>
    %85 = arith.addf %79, %84 : vector<8x64xf32>
    %c2_100 = arith.constant 2 : index
    %c2_101 = arith.constant 2 : index
    %c0_102 = arith.constant 0 : index
    %c0_103 = arith.constant 0 : index
    %86 = vector.load %arg11[%c2_100, %c2_101, %c0_102, %c0_103] : memref<3x3x8x64xbf16, #tpu.memory_space<vmem>>, vector<1x1x8x64xbf16>
    %87 = vector.shape_cast %86 : vector<1x1x8x64xbf16> to vector<8x64xbf16>
    %c8 = arith.constant 8 : index
    %c0_104 = arith.constant 0 : index
    %c0_105 = arith.constant 0 : index
    %88 = vector.load %arg4[%c8, %c0_104, %c0_105] : memref<9x64x64xbf16, #tpu.memory_space<vmem>>, vector<1x64x64xbf16>
    %89 = vector.shape_cast %88 : vector<1x64x64xbf16> to vector<64x64xbf16>
    %cst_106 = arith.constant dense<0.000000e+00> : vector<8x64xf32>
    %90 = tpu.matmul %87, %89, %cst_106 {dimension_numbers = #tpu.dot_dimension_numbers<[1], [0], [0], [1], [0, 0, 1, 1], [], []>} : vector<8x64xbf16>, vector<64x64xbf16>, vector<8x64xf32> -> vector<8x64xf32>
    %91 = arith.addf %85, %90 : vector<8x64xf32>
    %c0_107 = arith.constant 0 : index
    %c0_108 = arith.constant 0 : index
    %92 = vector.load %arg5[%c0_107, %c0_108] : memref<1x64xf32, #tpu.memory_space<vmem>>, vector<1x64xf32>
    %93 = vector.broadcast %92 : vector<1x64xf32> to vector<8x64xf32>
    %94 = arith.addf %91, %93 : vector<8x64xf32>
    %cst_109 = arith.constant 0.000000e+00 : f32
    %95 = vector.broadcast %cst_109 : f32 to vector<8x64xf32>
    %96 = arith.maximumf %94, %95 : vector<8x64xf32>
    %97 = arith.truncf %96 : vector<8x64xf32> to vector<8x64xbf16>
    %c0_110 = arith.constant 0 : index
    %c0_111 = arith.constant 0 : index
    %98 = vector.load %arg12[%c0_110, %c0_111] : memref<8x64xbf16, #tpu.memory_space<vmem>>, vector<8x64xbf16>
    tpu.vector_store %arg12[%c0_110, %c0_111], %97 {strides = array<i32>} : memref<8x64xbf16, #tpu.memory_space<vmem>>, vector<8x64xbf16>,
    %c0_112 = arith.constant 0 : index
    %c0_113 = arith.constant 0 : index
    %99 = vector.load %arg12[%c0_112, %c0_113] : memref<8x64xbf16, #tpu.memory_space<vmem>>, vector<8x64xbf16>
    %c0_114 = arith.constant 0 : index
    %c0_115 = arith.constant 0 : index
    %100 = vector.load %arg6[%c0_114, %c0_115] : memref<64x512xbf16, #tpu.memory_space<vmem>>, vector<64x512xbf16>
    %cst_116 = arith.constant dense<0.000000e+00> : vector<8x512xf32>
    %101 = tpu.matmul %99, %100, %cst_116 {dimension_numbers = #tpu.dot_dimension_numbers<[1], [0], [0], [1], [0, 0, 1, 1], [], []>} : vector<8x64xbf16>, vector<64x512xbf16>, vector<8x512xf32> -> vector<8x512xf32>
    %c0_117 = arith.constant 0 : index
    %c0_118 = arith.constant 0 : index
    %102 = vector.load %arg7[%c0_117, %c0_118] : memref<1x512xf32, #tpu.memory_space<vmem>>, vector<1x512xf32>
    %103 = vector.broadcast %102 : vector<1x512xf32> to vector<8x512xf32>
    %104 = arith.addf %101, %103 : vector<8x512xf32>
    %cst_119 = arith.constant 0.000000e+00 : f32
    %105 = vector.broadcast %cst_119 : f32 to vector<8x512xf32>
    %106 = arith.maximumf %104, %105 : vector<8x512xf32>
    %c0_120 = arith.constant 0 : index
    %c0_121 = arith.constant 0 : index
    %107 = vector.load %arg8[%c0_120, %c0_121] : memref<512x128xf32, #tpu.memory_space<vmem>>, vector<512x128xf32>
    %cst_122 = arith.constant dense<0.000000e+00> : vector<8x128xf32>
    %108 = tpu.matmul %106, %107, %cst_122 {dimension_numbers = #tpu.dot_dimension_numbers<[1], [0], [0], [1], [0, 0, 1, 1], [], []>} : vector<8x512xf32>, vector<512x128xf32>, vector<8x128xf32> -> vector<8x128xf32>
    %c0_123 = arith.constant 0 : index
    %c0_124 = arith.constant 0 : index
    %109 = vector.load %arg9[%c0_123, %c0_124] : memref<1x128xf32, #tpu.memory_space<vmem>>, vector<1x128xf32>
    %110 = vector.broadcast %109 : vector<1x128xf32> to vector<8x128xf32>
    %111 = arith.addf %108, %110 : vector<8x128xf32>
    %c0_125 = arith.constant 0 : index
    %c0_126 = arith.constant 0 : index
    %112 = vector.load %arg10[%c0_125, %c0_126] : memref<8x128xf32, #tpu.memory_space<vmem>>, vector<8x128xf32>
    tpu.vector_store %arg10[%c0_125, %c0_126], %111 {strides = array<i32>} : memref<8x128xf32, #tpu.memory_space<vmem>>, vector<8x128xf32>,
    return
  }
  func.func @transform_0(%arg0: i32) -> (i32, i32, i32, i32, i32) {
    %c0_i32 = arith.constant 0 : i32
    %c0_i32_0 = arith.constant 0 : i32
    %c0_i32_1 = arith.constant 0 : i32
    %c0_i32_2 = arith.constant 0 : i32
    %c0_i32_3 = arith.constant 0 : i32
    return %arg0, %c0_i32, %c0_i32_0, %c0_i32_1, %c0_i32_2 : i32, i32, i32, i32, i32
  }
  func.func @transform_1(%arg0: i32) -> (i32, i32, i32) {
    %c0_i32 = arith.constant 0 : i32
    %c0_i32_0 = arith.constant 0 : i32
    %c0_i32_1 = arith.constant 0 : i32
    %c0_i32_2 = arith.constant 0 : i32
    return %c0_i32, %c0_i32_0, %c0_i32_1 : i32, i32, i32
  }
  func.func @transform_2(%arg0: i32) -> (i32, i32) {
    %c0_i32 = arith.constant 0 : i32
    %c0_i32_0 = arith.constant 0 : i32
    %c0_i32_1 = arith.constant 0 : i32
    return %c0_i32, %c0_i32_0 : i32, i32
  }
  func.func @transform_3(%arg0: i32) -> (i32, i32, i32) {
    %c0_i32 = arith.constant 0 : i32
    %c0_i32_0 = arith.constant 0 : i32
    %c0_i32_1 = arith.constant 0 : i32
    %c0_i32_2 = arith.constant 0 : i32
    return %c0_i32, %c0_i32_0, %c0_i32_1 : i32, i32, i32
  }
  func.func @transform_4(%arg0: i32) -> (i32, i32) {
    %c0_i32 = arith.constant 0 : i32
    %c0_i32_0 = arith.constant 0 : i32
    %c0_i32_1 = arith.constant 0 : i32
    return %c0_i32, %c0_i32_0 : i32, i32
  }
  func.func @transform_5(%arg0: i32) -> (i32, i32) {
    %c0_i32 = arith.constant 0 : i32
    %c0_i32_0 = arith.constant 0 : i32
    %c0_i32_1 = arith.constant 0 : i32
    return %c0_i32, %c0_i32_0 : i32, i32
  }
  func.func @transform_6(%arg0: i32) -> (i32, i32) {
    %c0_i32 = arith.constant 0 : i32
    %c0_i32_0 = arith.constant 0 : i32
    %c0_i32_1 = arith.constant 0 : i32
    return %c0_i32, %c0_i32_0 : i32, i32
  }
  func.func @transform_7(%arg0: i32) -> (i32, i32) {
    %c0_i32 = arith.constant 0 : i32
    %c0_i32_0 = arith.constant 0 : i32
    %c0_i32_1 = arith.constant 0 : i32
    return %c0_i32, %c0_i32_0 : i32, i32
  }
  func.func @transform_8(%arg0: i32) -> (i32, i32) {
    %c0_i32 = arith.constant 0 : i32
    %c0_i32_0 = arith.constant 0 : i32
    %c0_i32_1 = arith.constant 0 : i32
    return %c0_i32, %c0_i32_0 : i32, i32
  }
  func.func @transform_9(%arg0: i32) -> (i32, i32) {
    %c0_i32 = arith.constant 0 : i32
    %c0_i32_0 = arith.constant 0 : i32
    return %arg0, %c0_i32 : i32, i32
  }
}

</mosaic_0001>

<llo_original>
// kernel: dqn_forward.2
$region0: #{dqn_forward.2}
  #allocation0 [shape = 'u32[]', space=smem, size = 0x4, offset = 0x4, fixed_abs, tag = 'smem constant byte address 0x4 - core index']
  #allocation1 [shape = 'u32[144,128]{1,0:T(1,128)}', space=vmem, size = 0x12000, scoped, tag = 'internal scratch']
  %s0 = inlined_call_operand.vmem [shape: bf16[128,256], index: 0, kind: input, shape index: {}]
  %s1 = inlined_call_operand.vmem [shape: bf16[256,32], index: 1, kind: input, shape index: {}]
  %s2 = inlined_call_operand.vmem [shape: f32[1,32], index: 2, kind: input, shape index: {}]
  %s3 = inlined_call_operand.vmem [shape: bf16[128,32], index: 3, kind: output, shape index: {}]
  %s4 = sld [smem:[#allocation0]]
  $region45: #{dqn_forward.2} parent=0
    _
  %s6 = ssub.s32 1, %s4
  %s7 = scalar_select 0, %s6, %s4
  loop: start=0, step=1, limit=4
  $region2: #{dqn_forward.2} parent=0 // loop_pre_header
    _
  $region3: #{dqn_forward.2} parent=0 // loop_header
    %s9 = sphi 0, %s13
    %p10 = scmp.ge.s32.totalorder %s9, 4
    %s19 = sphi 0, %s21
    %s22 = sphi 0, %s19
    %s23 = sphi 0, %s22
    %s39 = sphi 0, %s23
    %s43 = sphi 0, %s43
    %s45 = sphi 0, %s43
    %s46 = sphi 0, %s45
    %s60 = sphi 0, %s46
    %s64 = sphi 0, %s64
    %s66 = sphi 0, %s64
    %s67 = sphi 0, %s66
    %s81 = sphi 0, %s67
    %s87 = sphi 0, %s89
    %s90 = sphi 0, %s87
    %s91 = sphi 0, %s90
    %s107 = sphi 0, %s91
  $region4: #{dqn_forward.2} parent=0 // loop_header_branch
    %12 = sbr.rel (%p10) target = $region8
  $region5: #{dqn_forward.2} parent=0 // loop_body
    %s14 = ssub.s32 %s9, 1
    %s15 = ssub.s32 %s9, 2
    %s16 = sadd.s32 %s9, 1
    %s17 = ssub.s32 %s9, %s16
    %p18 = scmp.eq.s32.totalorder %s17, 0
    %s20 = sadd.s32 %s19, 1
    %s21 = scalar_select %p18, %s19, %s20
    %p24 = pneg %p18
    %p25 = scmp.eq.s32.totalorder %s9, 1
    %p26 = por %p24, %p25
    %p27 = scmp.ne.s32.totalorder %s19, %s22
    %p28 = scmp.eq.s32.totalorder %s9, 0
    %p29 = por %p27, %p28
    %p30 = scmp.ne.s32.totalorder %s19, %s22
    %p31 = scmp.eq.s32.totalorder %s14, 1
    %p32 = por %p30, %p31
    %p33 = scmp.ne.s32.totalorder %s22, %s23
    %p34 = scmp.eq.s32.totalorder %s14, 0
    %p35 = por %p33, %p34
    %p36 = scmp.ne.s32.totalorder %s22, %s23
    %p37 = scmp.eq.s32.totalorder %s15, 1
    %p38 = por %p36, %p37
    %p40 = scmp.ne.s32.totalorder %s23, %s39
    %p41 = scmp.eq.s32.totalorder %s15, 0
    %p42 = por %p40, %p41
    %s44 = sadd.s32 %s43, 1
    %p47 = scmp.eq.s32.totalorder %s9, 1
    %p48 = scmp.ne.s32.totalorder %s43, %s45
    %p49 = scmp.eq.s32.totalorder %s9, 0
    %p50 = por %p48, %p49
    %p51 = scmp.ne.s32.totalorder %s43, %s45
    %p52 = scmp.eq.s32.totalorder %s14, 1
    %p53 = por %p51, %p52
    %p54 = scmp.ne.s32.totalorder %s45, %s46
    %p55 = scmp.eq.s32.totalorder %s14, 0
    %p56 = por %p54, %p55
    %p57 = scmp.ne.s32.totalorder %s45, %s46
    %p58 = scmp.eq.s32.totalorder %s15, 1
    %p59 = por %p57, %p58
    %p61 = scmp.ne.s32.totalorder %s46, %s60
    %p62 = scmp.eq.s32.totalorder %s15, 0
    %p63 = por %p61, %p62
    %s65 = sadd.s32 %s64, 1
    %p68 = scmp.eq.s32.totalorder %s9, 1
    %p69 = scmp.ne.s32.totalorder %s64, %s66
    %p70 = scmp.eq.s32.totalorder %s9, 0
    %p71 = por %p69, %p70
    %p72 = scmp.ne.s32.totalorder %s64, %s66
    %p73 = scmp.eq.s32.totalorder %s14, 1
    %p74 = por %p72, %p73
    %p75 = scmp.ne.s32.totalorder %s66, %s67
    %p76 = scmp.eq.s32.totalorder %s14, 0
    %p77 = por %p75, %p76
    %p78 = scmp.ne.s32.totalorder %s66, %s67
    %p79 = scmp.eq.s32.totalorder %s15, 1
    %p80 = por %p78, %p79
    %p82 = scmp.ne.s32.totalorder %s67, %s81
    %p83 = scmp.eq.s32.totalorder %s15, 0
    %p84 = por %p82, %p83
    %s85 = ssub.s32 %s9, %s16
    %p86 = scmp.eq.s32.totalorder %s85, 0
    %s88 = sadd.s32 %s87, 1
    %s89 = scalar_select %p86, %s87, %s88
    %p92 = pneg %p86
    %p93 = scmp.eq.s32.totalorder %s9, 1
    %p94 = por %p92, %p93
    %p95 = scmp.ne.s32.totalorder %s87, %s90
    %p96 = scmp.eq.s32.totalorder %s9, 0
    %p97 = por %p95, %p96
    %p98 = scmp.ne.s32.totalorder %s87, %s90
    %p99 = scmp.eq.s32.totalorder %s14, 1
    %p100 = por %p98, %p99
    %p101 = scmp.ne.s32.totalorder %s90, %s91
    %p102 = scmp.eq.s32.totalorder %s14, 0
    %p103 = por %p101, %p102
    %p104 = scmp.ne.s32.totalorder %s90, %s91
    %p105 = scmp.eq.s32.totalorder %s15, 1
    %p106 = por %p104, %p105
    %p108 = scmp.ne.s32.totalorder %s91, %s107
    %p109 = scmp.eq.s32.totalorder %s15, 0
    %p110 = por %p108, %p109
    %p111 = scmp.le.s32.totalorder 1, %s9
    %p112 = scmp.lt.s32.totalorder %s9, 3
    %p113 = pnand %p111, %p112
    %p114 = pneg %p113
    // Predicated region
    $region9: #{dqn_forward.2} parent=5 // pred_check
      _
    $region10: #{dqn_forward.2} parent=5 // pred_check_branch
      %116 = sbr.rel (%p113) target = $region12
    $region11: #{dqn_forward.2} parent=5 // pred_region
      %s117 = ssub.s32 %s9, 1
      // Predicated region
      $region13: #{dqn_forward.2} parent=11 // pred_check
        %p118 = pneg %p56
      $region14: #{dqn_forward.2} parent=11 // pred_check_branch
        %120 = sbr.rel (%p118) target = $region16
      $region15: #{dqn_forward.2} parent=11 // pred_region
        _
      $region16: #{dqn_forward.2} parent=11 // pred_fallthru
        _
      // Predicated region
      $region17: #{dqn_forward.2} parent=11 // pred_check
        %p121 = pneg %p77
      $region18: #{dqn_forward.2} parent=11 // pred_check_branch
        %123 = sbr.rel (%p121) target = $region20
      $region19: #{dqn_forward.2} parent=11 // pred_region
        _
      $region20: #{dqn_forward.2} parent=11 // pred_fallthru
        _
    $region12: #{dqn_forward.2} parent=5 // pred_fallthru
      _
    %p124 = scmp.lt.s32.totalorder %s9, 2
    // Predicated region
    $region21: #{dqn_forward.2} parent=5 // pred_check
      %p125 = pneg %p124
    $region22: #{dqn_forward.2} parent=5 // pred_check_branch
      %127 = sbr.rel (%p125) target = $region24
    $region23: #{dqn_forward.2} parent=5 // pred_region
      // Predicated region
      $region25: #{dqn_forward.2} parent=23 // pred_check
        %p128 = pneg %p29
      $region26: #{dqn_forward.2} parent=23 // pred_check_branch
        %130 = sbr.rel (%p128) target = $region28
      $region27: #{dqn_forward.2} parent=23 // pred_region
        %s131 = smul.u32 8, %s9
        %p132 = scmp.lt.s32.totalorder %s131, 15
        %s133 = scalar_select %p132, %s131, 15
        %s134 = smul.addr %s133, 2
        %s135 = smul.addr %s134, 4
        %s136 = scalar_lea.vmem %s0, %s135
        %s137 = smul.u32 8, %s9
      $region28: #{dqn_forward.2} parent=23 // pred_fallthru
        _
    $region24: #{dqn_forward.2} parent=5 // pred_fallthru
      _
    %p138 = scmp.le.s32.totalorder 1, %s9
    %p139 = scmp.lt.s32.totalorder %s9, 3
    %p140 = pnand %p138, %p139
    %p141 = pneg %p140
    // Predicated region
    $region29: #{dqn_forward.2} parent=5 // pred_check
      _
    $region30: #{dqn_forward.2} parent=5 // pred_check_branch
      %143 = sbr.rel (%p140) target = $region32
    $region31: #{dqn_forward.2} parent=5 // pred_region
      %s144 = ssub.s32 %s9, 1
      %s145 = smul.u32 8, %s14
      %p146 = scmp.lt.s32.totalorder %s145, 15
      %s147 = scalar_select %p146, %s145, 15
      %s148 = smul.addr %s147, 2
      %s149 = smul.addr %s148, 4
      %s150 = scalar_lea.vmem %s0, %s149
      %p151 = pneg %p35
      %p152 = pneg %p32
      %p153 = pneg %p56
      %p154 = pneg %p53
      %p155 = pneg %p77
      %p156 = pneg %p74
      %p157 = pneg %p103
      %p158 = pneg %p100
      %s159 = smul.u32 8, %s14
      %p160 = scmp.lt.s32.totalorder %s159, 15
      %s161 = scalar_select %p160, %s159, 15
      %s162 = smul.addr %s161, 4
      %s163 = scalar_lea.vmem %s3, %s162
      %s164 = smul.u32 8, %s14
      %p165 = scmp.lt.s32.totalorder %s164, 15
      %s166 = scalar_select %p165, %s164, 15
      %s167 = smul.addr %s166, 2
      %s168 = smul.addr %s167, 4
      %s169 = scalar_lea.vmem %s0, %s168
      %s170 = smul.u32 8, %s14
      %s171 = smul.u32 8, %s14
      %p172 = scmp.lt.s32.totalorder %s171, 15
      %s173 = scalar_select %p172, %s171, 15
      %s174 = smul.addr %s173, 4
      %s175 = scalar_lea.vmem %s3, %s174
      %s176 = smul.u32 8, %s14
      %v178 = vld [vmem:[%s169] sm:$0xff]
      %v179 = vld [vmem:[%s169 + $0x8] sm:$0xff]
      %v180 = vld [vmem:[%s169 + $0x10] sm:$0xff]
      %v181 = vld [vmem:[%s169 + $0x18] sm:$0xff]
      %v182 = vld [vmem:[%s169 + $0x20] sm:$0xff]
      %v183 = vld [vmem:[%s169 + $0x28] sm:$0xff]
      %v184 = vld [vmem:[%s169 + $0x30] sm:$0xff]
      %v185 = vld [vmem:[%s169 + $0x38] sm:$0xff]
      %v186 = vld [vmem:[%s1] sm:$0xf]
      %v187 = vld [vmem:[%s1 + $0x4] sm:$0xf]
      %v188 = vld [vmem:[%s1 + $0x8] sm:$0xf]
      %v189 = vld [vmem:[%s1 + $0xc] sm:$0xf]
      %v190 = vld [vmem:[%s1 + $0x10] sm:$0xf]
      %v191 = vld [vmem:[%s1 + $0x14] sm:$0xf]
      %v192 = vld [vmem:[%s1 + $0x18] sm:$0xf]
      %v193 = vld [vmem:[%s1 + $0x1c] sm:$0xf]
      %v194 = vld [vmem:[%s1 + $0x20] sm:$0xf]
      %v195 = vld [vmem:[%s1 + $0x24] sm:$0xf]
      %v196 = vld [vmem:[%s1 + $0x28] sm:$0xf]
      %v197 = vld [vmem:[%s1 + $0x2c] sm:$0xf]
      %v198 = vld [vmem:[%s1 + $0x30] sm:$0xf]
      %v199 = vld [vmem:[%s1 + $0x34] sm:$0xf]
      %v200 = vld [vmem:[%s1 + $0x38] sm:$0xf]
      %v201 = vld [vmem:[%s1 + $0x3c] sm:$0xf]
      %v202 = vld [vmem:[%s1 + $0x40] sm:$0xf]
      %v203 = vld [vmem:[%s1 + $0x44] sm:$0xf]
      %v204 = vld [vmem:[%s1 + $0x48] sm:$0xf]
      %v205 = vld [vmem:[%s1 + $0x4c] sm:$0xf]
      %v206 = vld [vmem:[%s1 + $0x50] sm:$0xf]
      %v207 = vld [vmem:[%s1 + $0x54] sm:$0xf]
      %v208 = vld [vmem:[%s1 + $0x58] sm:$0xf]
      %v209 = vld [vmem:[%s1 + $0x5c] sm:$0xf]
      %v210 = vld [vmem:[%s1 + $0x60] sm:$0xf]
      %v211 = vld [vmem:[%s1 + $0x64] sm:$0xf]
      %v212 = vld [vmem:[%s1 + $0x68] sm:$0xf]
      %v213 = vld [vmem:[%s1 + $0x6c] sm:$0xf]
      %v214 = vld [vmem:[%s1 + $0x70] sm:$0xf]
      %v215 = vld [vmem:[%s1 + $0x74] sm:$0xf]
      %v216 = vld [vmem:[%s1 + $0x78] sm:$0xf]
      %v217 = vld [vmem:[%s1 + $0x7c] sm:$0xf]
      %v218 = vld [vmem:[%s2] sm:$0x1]
      %v220 = vlaneseq
      %v221 = vshrl.u32 %v220, 7
      %v222 = vsub.s32 0, %v221
      %v223 = vrot.slane %v218, %v222
      %v233 = vunpack.c.l.b16 %v178
      %v234 = vunpack.c.h.b16 %v178
      %v235 = vunpack.c.l.b16 %v179
      %v236 = vunpack.c.h.b16 %v179
      %v237 = vunpack.c.l.b16 %v180
      %v238 = vunpack.c.h.b16 %v180
      %v239 = vunpack.c.l.b16 %v181
      %v240 = vunpack.c.h.b16 %v181
      %v241 = vunpack.c.l.b16 %v182
      %v242 = vunpack.c.h.b16 %v182
      %v243 = vunpack.c.l.b16 %v183
      %v244 = vunpack.c.h.b16 %v183
      %v245 = vunpack.c.l.b16 %v184
      %v246 = vunpack.c.h.b16 %v184
      %v247 = vunpack.c.l.b16 %v185
      %v248 = vunpack.c.h.b16 %v185
      %v249 = vpack.c.b16 %v235, %v233
      %v250 = vpack.c.b16 %v236, %v234
      %v251 = vpack.c.b16 %v239, %v237
      %v252 = vpack.c.b16 %v240, %v238
      %v253 = vpack.c.b16 %v243, %v241
      %v254 = vpack.c.b16 %v244, %v242
      %v255 = vpack.c.b16 %v247, %v245
      %v256 = vpack.c.b16 %v248, %v246
      %v297 = vunpack.c.l.b16 %v186
      %v298 = vunpack.c.l.b16 %v187
      %v299 = vunpack.c.l.b16 %v188
      %v300 = vunpack.c.l.b16 %v189
      %v301 = vunpack.c.l.b16 %v190
      %v302 = vunpack.c.l.b16 %v191
      %v303 = vunpack.c.l.b16 %v192
      %v304 = vunpack.c.l.b16 %v193
      %v305 = vunpack.c.l.b16 %v194
      %v306 = vunpack.c.l.b16 %v195
      %v307 = vunpack.c.l.b16 %v196
      %v308 = vunpack.c.l.b16 %v197
      %v309 = vunpack.c.l.b16 %v198
      %v310 = vunpack.c.l.b16 %v199
      %v311 = vunpack.c.l.b16 %v200
      %v312 = vunpack.c.l.b16 %v201
      %v313 = vunpack.c.l.b16 %v202
      %v314 = vunpack.c.l.b16 %v203
      %v315 = vunpack.c.l.b16 %v204
      %v316 = vunpack.c.l.b16 %v205
      %v317 = vunpack.c.l.b16 %v206
      %v318 = vunpack.c.l.b16 %v207
      %v319 = vunpack.c.l.b16 %v208
      %v320 = vunpack.c.l.b16 %v209
      %v321 = vunpack.c.l.b16 %v210
      %v322 = vunpack.c.l.b16 %v211
      %v323 = vunpack.c.l.b16 %v212
      %v324 = vunpack.c.l.b16 %v213
      %v325 = vunpack.c.l.b16 %v214
      %v326 = vunpack.c.l.b16 %v215
      %v327 = vunpack.c.l.b16 %v216
      %v328 = vunpack.c.l.b16 %v217
      %v329 = vpack.c.b16 %v298, %v297
      %v330 = vpack.c.b16 %v300, %v299
      %v331 = vpack.c.b16 %v302, %v301
      %v332 = vpack.c.b16 %v304, %v303
      %v333 = vpack.c.b16 %v306, %v305
      %v334 = vpack.c.b16 %v308, %v307
      %v335 = vpack.c.b16 %v310, %v309
      %v336 = vpack.c.b16 %v312, %v311
      %v337 = vpack.c.b16 %v314, %v313
      %v338 = vpack.c.b16 %v316, %v315
      %v339 = vpack.c.b16 %v318, %v317
      %v340 = vpack.c.b16 %v320, %v319
      %v341 = vpack.c.b16 %v322, %v321
      %v342 = vpack.c.b16 %v324, %v323
      %v343 = vpack.c.b16 %v326, %v325
      %v344 = vpack.c.b16 %v328, %v327
      %361 = vmatprep.subr.bf16.mxu0 0
      %362 = vmatpush1.bf16.msra.mxu0 %v329
      %363 = vmatprep.subr.bf16.mxu0 0
      %364 = vmatpush1.bf16.msra.mxu0 %v330
      %365 = vmatprep.subr.bf16.mxu0 0
      %366 = vmatpush1.bf16.msra.mxu0 %v331
      %367 = vmatprep.subr.bf16.mxu0 0
      %368 = vmatpush1.bf16.msra.mxu0 %v332
      %369 = vmatprep.subr.bf16.mxu0 0
      %370 = vmatpush1.bf16.msra.mxu0 %v333
      %371 = vmatprep.subr.bf16.mxu0 0
      %372 = vmatpush1.bf16.msra.mxu0 %v334
      %373 = vmatprep.subr.bf16.mxu0 0
      %374 = vmatpush1.bf16.msra.mxu0 %v335
      %375 = vmatprep.subr.bf16.mxu0 0
      %376 = vmatpush1.bf16.msra.mxu0 %v336
      %377 = vmatprep.subr.bf16.mxu0 0
      %378 = vmatpush1.bf16.msra.mxu0 %v337
      %379 = vmatprep.subr.bf16.mxu0 0
      %380 = vmatpush1.bf16.msra.mxu0 %v338
      %381 = vmatprep.subr.bf16.mxu0 0
      %382 = vmatpush1.bf16.msra.mxu0 %v339
      %383 = vmatprep.subr.bf16.mxu0 0
      %384 = vmatpush1.bf16.msra.mxu0 %v340
      %385 = vmatprep.subr.bf16.mxu0 0
      %386 = vmatpush1.bf16.msra.mxu0 %v341
      %387 = vmatprep.subr.bf16.mxu0 0
      %388 = vmatpush1.bf16.msra.mxu0 %v342
      %389 = vmatprep.subr.bf16.mxu0 0
      %390 = vmatpush1.bf16.msra.mxu0 %v343
      %391 = vmatprep.subr.bf16.mxu0 0
      %392 = vmatpush1.bf16.msra.mxu0 %v344
      %393 = vmatprep.mubr.bf16.mxu0 %v250
      %394 = vmatmul.mubr.bf16.gmra.mrb[0].mxu0 %v249
      %v395 = vpop.f32.mrb[0].mxu0
      %v396 = vadd.f32 %v223, %v395
      %v397 = vpop.f32.mrb[0].mxu0
      %v398 = vpop.f32.mrb[0].mxu0
      %v399 = vadd.f32 %v223, %v398
      %v400 = vpop.f32.mrb[0].mxu0
      %401 = vmatprep.mubr.bf16.mxu0 %v252
      %402 = vmatmul.mubr.bf16.gmra.mrb[0].mxu0 %v251
      %v403 = vpop.f32.mrb[0].mxu0
      %v404 = vadd.f32 %v223, %v403
      %v405 = vpop.f32.mrb[0].mxu0
      %v406 = vpop.f32.mrb[0].mxu0
      %v407 = vadd.f32 %v223, %v406
      %v408 = vpop.f32.mrb[0].mxu0
      %409 = vmatprep.mubr.bf16.mxu0 %v254
      %410 = vmatmul.mubr.bf16.gmra.mrb[0].mxu0 %v253
      %v411 = vpop.f32.mrb[0].mxu0
      %v412 = vadd.f32 %v223, %v411
      %v413 = vpop.f32.mrb[0].mxu0
      %v414 = vpop.f32.mrb[0].mxu0
      %v415 = vadd.f32 %v223, %v414
      %v416 = vpop.f32.mrb[0].mxu0
      %417 = vmatprep.mubr.bf16.mxu0 %v256
      %418 = vmatmul.mubr.bf16.gmra.mrb[0].mxu0 %v255
      %v419 = vpop.f32.mrb[0].mxu0
      %v420 = vadd.f32 %v223, %v419
      %v421 = vpop.f32.mrb[0].mxu0
      %v422 = vpop.f32.mrb[0].mxu0
      %v423 = vadd.f32 %v223, %v422
      %v424 = vpop.f32.mrb[0].mxu0
      %425 = vdwg.mxu0
      %v426 = vmax.f32 %v396, 0.0
      %v427 = vmax.f32 %v399, 0.0
      %v428 = vmax.f32 %v404, 0.0
      %v429 = vmax.f32 %v407, 0.0
      %v430 = vmax.f32 %v412, 0.0
      %v431 = vmax.f32 %v415, 0.0
      %v432 = vmax.f32 %v420, 0.0
      %v433 = vmax.f32 %v423, 0.0
      %v434 = vpack.c.bf16 %v427, %v426
      %v435 = vpack.c.bf16 %v429, %v428
      %v436 = vpack.c.bf16 %v431, %v430
      %v437 = vpack.c.bf16 %v433, %v432
      %v442 = vunpack.c.l.b16 %v434
      %v443 = vunpack.c.h.b16 %v434
      %v444 = vunpack.c.l.b16 %v435
      %v445 = vunpack.c.h.b16 %v435
      %v446 = vunpack.c.l.b16 %v436
      %v447 = vunpack.c.h.b16 %v436
      %v448 = vunpack.c.l.b16 %v437
      %v449 = vunpack.c.h.b16 %v437
      %v450 = vpack.c.b16 %v442, %v442
      %v451 = vpack.c.b16 %v443, %v443
      %v452 = vpack.c.b16 %v444, %v444
      %v453 = vpack.c.b16 %v445, %v445
      %v454 = vpack.c.b16 %v446, %v446
      %v455 = vpack.c.b16 %v447, %v447
      %v456 = vpack.c.b16 %v448, %v448
      %v457 = vpack.c.b16 %v449, %v449
      %vm466 = vcmask 257024
      %467 = vst.msk [vmem:[%s175] sm:$0xf] %vm466, %v450
      %468 = vst.msk [vmem:[%s175 + $0x4] sm:$0xf] %vm466, %v451
      %469 = vst.msk [vmem:[%s175 + $0x8] sm:$0xf] %vm466, %v452
      %470 = vst.msk [vmem:[%s175 + $0xc] sm:$0xf] %vm466, %v453
      %471 = vst.msk [vmem:[%s175 + $0x10] sm:$0xf] %vm466, %v454
      %472 = vst.msk [vmem:[%s175 + $0x14] sm:$0xf] %vm466, %v455
      %473 = vst.msk [vmem:[%s175 + $0x18] sm:$0xf] %vm466, %v456
      %474 = vst.msk [vmem:[%s175 + $0x1c] sm:$0xf] %vm466, %v457
      %s475 = smul.u32 8, %s14
      %p476 = scmp.lt.s32.totalorder %s475, 15
      %s477 = scalar_select %p476, %s475, 15
      %s478 = smul.addr %s477, 4
      %s479 = scalar_lea.vmem %s3, %s478
      // Predicated region
      $region33: #{dqn_forward.2} parent=31 // pred_check
        %p480 = pneg %p100
      $region34: #{dqn_forward.2} parent=31 // pred_check_branch
        %482 = sbr.rel (%p480) target = $region36
      $region35: #{dqn_forward.2} parent=31 // pred_region
        %s483 = smul.u32 8, %s14
      $region36: #{dqn_forward.2} parent=31 // pred_fallthru
        _
    $region32: #{dqn_forward.2} parent=5 // pred_fallthru
      _
    %p484 = scmp.le.s32.totalorder 2, %s9
    // Predicated region
    $region37: #{dqn_forward.2} parent=5 // pred_check
      %p485 = pneg %p484
    $region38: #{dqn_forward.2} parent=5 // pred_check_branch
      %487 = sbr.rel (%p485) target = $region40
    $region39: #{dqn_forward.2} parent=5 // pred_region
      %s488 = ssub.s32 %s9, 2
      // Predicated region
      $region41: #{dqn_forward.2} parent=39 // pred_check
        %p489 = pneg %p106
      $region42: #{dqn_forward.2} parent=39 // pred_check_branch
        %491 = sbr.rel (%p489) target = $region44
      $region43: #{dqn_forward.2} parent=39 // pred_region
        %s492 = smul.u32 8, %s15
        %p493 = scmp.lt.s32.totalorder %s492, 15
        %s494 = scalar_select %p493, %s492, 15
        %s495 = smul.addr %s494, 4
        %s496 = scalar_lea.vmem %s3, %s495
      $region44: #{dqn_forward.2} parent=39 // pred_fallthru
        _
    $region40: #{dqn_forward.2} parent=5 // pred_fallthru
      _
  $region6: #{dqn_forward.2} parent=0 // loop_footer
    %s13 = sadd.s32 1, %s9
  $region7: #{dqn_forward.2} parent=0 // loop_footer_branch
    %8 = sbr.rel target = $region3
  $region8: #{dqn_forward.2} parent=0 // loop_exit
    _

// kernel: dqn_forward.3
$region0: #{dqn_forward.3}
  #allocation0 [shape = 'u32[]', space=smem, size = 0x4, offset = 0x4, fixed_abs, tag = 'smem constant byte address 0x4 - core index']
  #allocation1 [shape = 'u32[144,128]{1,0:T(1,128)}', space=vmem, size = 0x12000, scoped, tag = 'internal scratch']
  #allocation2 [shape = 'bf16[3,3,8,64]{3,2,1,0:T(8,128)(2,1)}', space=vmem, size = 0x4800, scoped, tag = 'scratch operand']
  #allocation3 [shape = 'bf16[8,64]{1,0:T(8,128)(2,1)}', space=vmem, size = 0x800, scoped, tag = 'scratch operand']
  %s0 = inlined_call_operand.vmem [shape: bf16[1,4,4,8,128], index: 0, kind: input, shape index: {}]
  %s1 = inlined_call_operand.vmem [shape: bf16[4,128,64], index: 1, kind: input, shape index: {}]
  %s2 = inlined_call_operand.vmem [shape: f32[1,64], index: 2, kind: input, shape index: {}]
  %s3 = inlined_call_operand.vmem [shape: bf16[9,64,64], index: 3, kind: input, shape index: {}]
  %s4 = inlined_call_operand.vmem [shape: f32[1,64], index: 4, kind: input, shape index: {}]
  %s5 = inlined_call_operand.vmem [shape: bf16[64,512], index: 5, kind: input, shape index: {}]
  %s6 = inlined_call_operand.vmem [shape: f32[1,512], index: 6, kind: input, shape index: {}]
  %s7 = inlined_call_operand.vmem [shape: f32[512,128], index: 7, kind: input, shape index: {}]
  %s8 = inlined_call_operand.vmem [shape: f32[1,128], index: 8, kind: input, shape index: {}]
  %s9 = inlined_call_operand.vmem [shape: f32[8,128], index: 9, kind: output, shape index: {}]
  %s10 = sld [smem:[#allocation0]]
  $region46: #{dqn_forward.3} parent=0
    _
  %s12 = ssub.s32 1, %s10
  %s13 = scalar_select 0, %s12, %s10
  // Predicated region
  $region2: #{dqn_forward.3} parent=0 // pred_check
    _
  $region3: #{dqn_forward.3} parent=0 // pred_check_branch
    %15 = sbr.rel (0) target = $region5
  $region4: #{dqn_forward.3} parent=0 // pred_region
    _
  $region5: #{dqn_forward.3} parent=0 // pred_fallthru
    _
  // Predicated region
  $region6: #{dqn_forward.3} parent=0 // pred_check
    _
  $region7: #{dqn_forward.3} parent=0 // pred_check_branch
    %17 = sbr.rel (0) target = $region9
  $region8: #{dqn_forward.3} parent=0 // pred_region
    _
  $region9: #{dqn_forward.3} parent=0 // pred_fallthru
    _
  // Predicated region
  $region10: #{dqn_forward.3} parent=0 // pred_check
    _
  $region11: #{dqn_forward.3} parent=0 // pred_check_branch
    %19 = sbr.rel (0) target = $region13
  $region12: #{dqn_forward.3} parent=0 // pred_region
    _
  $region13: #{dqn_forward.3} parent=0 // pred_fallthru
    _
  // Predicated region
  $region14: #{dqn_forward.3} parent=0 // pred_check
    _
  $region15: #{dqn_forward.3} parent=0 // pred_check_branch
    %21 = sbr.rel (0) target = $region17
  $region16: #{dqn_forward.3} parent=0 // pred_region
    _
  $region17: #{dqn_forward.3} parent=0 // pred_fallthru
    _
  // Predicated region
  $region18: #{dqn_forward.3} parent=0 // pred_check
    _
  $region19: #{dqn_forward.3} parent=0 // pred_check_branch
    %23 = sbr.rel (0) target = $region21
  $region20: #{dqn_forward.3} parent=0 // pred_region
    _
  $region21: #{dqn_forward.3} parent=0 // pred_fallthru
    _
  // Predicated region
  $region22: #{dqn_forward.3} parent=0 // pred_check
    _
  $region23: #{dqn_forward.3} parent=0 // pred_check_branch
    %25 = sbr.rel (0) target = $region25
  $region24: #{dqn_forward.3} parent=0 // pred_region
    _
  $region25: #{dqn_forward.3} parent=0 // pred_fallthru
    _
  // Predicated region
  $region26: #{dqn_forward.3} parent=0 // pred_check
    _
  $region27: #{dqn_forward.3} parent=0 // pred_check_branch
    %27 = sbr.rel (0) target = $region29
  $region28: #{dqn_forward.3} parent=0 // pred_region
    _
  $region29: #{dqn_forward.3} parent=0 // pred_fallthru
    _
  // Predicated region
  $region30: #{dqn_forward.3} parent=0 // pred_check
    _
  $region31: #{dqn_forward.3} parent=0 // pred_check_branch
    %29 = sbr.rel (0) target = $region33
  $region32: #{dqn_forward.3} parent=0 // pred_region
    _
  $region33: #{dqn_forward.3} parent=0 // pred_fallthru
    _
  // Predicated region
  $region34: #{dqn_forward.3} parent=0 // pred_check
    _
  $region35: #{dqn_forward.3} parent=0 // pred_check_branch
    %31 = sbr.rel (0) target = $region37
  $region36: #{dqn_forward.3} parent=0 // pred_region
    _
  $region37: #{dqn_forward.3} parent=0 // pred_fallthru
    _
  %v33 = vld [vmem:[%s0] sm:$0xf]
  %v34 = vld [vmem:[%s0 + $0x4] sm:$0xf]
  %v35 = vld [vmem:[%s0 + $0x8] sm:$0xf]
  %v36 = vld [vmem:[%s0 + $0x10] sm:$0xf]
  %v37 = vld [vmem:[%s0 + $0x14] sm:$0xf]
  %v38 = vld [vmem:[%s0 + $0x18] sm:$0xf]
  %v39 = vld [vmem:[%s0 + $0x20] sm:$0xf]
  %v40 = vld [vmem:[%s0 + $0x24] sm:$0xf]
  %v41 = vld [vmem:[%s0 + $0x28] sm:$0xf]
  %v42 = vld [vmem:[%s1] sm:$0xf]
  %v43 = vld [vmem:[%s1 + $0x4] sm:$0xf]
  %v44 = vld [vmem:[%s1 + $0x8] sm:$0xf]
  %v45 = vld [vmem:[%s1 + $0xc] sm:$0xf]
  %v46 = vld [vmem:[%s1 + $0x10] sm:$0xf]
  %v47 = vld [vmem:[%s1 + $0x14] sm:$0xf]
  %v48 = vld [vmem:[%s1 + $0x18] sm:$0xf]
  %v49 = vld [vmem:[%s1 + $0x1c] sm:$0xf]
  %v50 = vld [vmem:[%s1 + $0x20] sm:$0xf]
  %v51 = vld [vmem:[%s1 + $0x24] sm:$0xf]
  %v52 = vld [vmem:[%s1 + $0x28] sm:$0xf]
  %v53 = vld [vmem:[%s1 + $0x2c] sm:$0xf]
  %v54 = vld [vmem:[%s1 + $0x30] sm:$0xf]
  %v55 = vld [vmem:[%s1 + $0x34] sm:$0xf]
  %v56 = vld [vmem:[%s1 + $0x38] sm:$0xf]
  %v57 = vld [vmem:[%s1 + $0x3c] sm:$0xf]
  %s58 = scalar_lea.vmem %s0, 4
  %v59 = vld [vmem:[%s58] sm:$0xf]
  %v60 = vld [vmem:[%s58 + $0x4] sm:$0xf]
  %v61 = vld [vmem:[%s58 + $0x8] sm:$0xf]
  %v62 = vld [vmem:[%s58 + $0x10] sm:$0xf]
  %v63 = vld [vmem:[%s58 + $0x14] sm:$0xf]
  %v64 = vld [vmem:[%s58 + $0x18] sm:$0xf]
  %v65 = vld [vmem:[%s58 + $0x20] sm:$0xf]
  %v66 = vld [vmem:[%s58 + $0x24] sm:$0xf]
  %v67 = vld [vmem:[%s58 + $0x28] sm:$0xf]
  %s68 = scalar_lea.vmem %s1, 64
  %v69 = vld [vmem:[%s68] sm:$0xf]
  %v70 = vld [vmem:[%s68 + $0x4] sm:$0xf]
  %v71 = vld [vmem:[%s68 + $0x8] sm:$0xf]
  %v72 = vld [vmem:[%s68 + $0xc] sm:$0xf]
  %v73 = vld [vmem:[%s68 + $0x10] sm:$0xf]
  %v74 = vld [vmem:[%s68 + $0x14] sm:$0xf]
  %v75 = vld [vmem:[%s68 + $0x18] sm:$0xf]
  %v76 = vld [vmem:[%s68 + $0x1c] sm:$0xf]
  %v77 = vld [vmem:[%s68 + $0x20] sm:$0xf]
  %v78 = vld [vmem:[%s68 + $0x24] sm:$0xf]
  %v79 = vld [vmem:[%s68 + $0x28] sm:$0xf]
  %v80 = vld [vmem:[%s68 + $0x2c] sm:$0xf]
  %v81 = vld [vmem:[%s68 + $0x30] sm:$0xf]
  %v82 = vld [vmem:[%s68 + $0x34] sm:$0xf]
  %v83 = vld [vmem:[%s68 + $0x38] sm:$0xf]
  %v84 = vld [vmem:[%s68 + $0x3c] sm:$0xf]
  %v94 = vunpack.c.l.b16 %v59
  %v95 = vunpack.c.l.b16 %v60
  %v96 = vunpack.c.l.b16 %v61
  %v97 = vunpack.c.l.b16 %v62
  %v98 = vunpack.c.l.b16 %v63
  %v99 = vunpack.c.l.b16 %v64
  %v100 = vunpack.c.l.b16 %v65
  %v101 = vunpack.c.l.b16 %v66
  %v102 = vunpack.c.l.b16 %v67
  %v103 = vpack.c.b16 %v95, %v94
  %v104 = vpack.c.b16 %v97, %v96
  %v105 = vpack.c.b16 %v99, %v98
  %v106 = vpack.c.b16 %v101, %v100
  %v107 = vpack.c.b16 %v102, %v102
  %v129 = vunpack.c.l.b16 %v69
  %v130 = vunpack.c.l.b16 %v70
  %v131 = vunpack.c.l.b16 %v71
  %v132 = vunpack.c.l.b16 %v72
  %v133 = vunpack.c.l.b16 %v73
  %v134 = vunpack.c.l.b16 %v74
  %v135 = vunpack.c.l.b16 %v75
  %v136 = vunpack.c.l.b16 %v76
  %v137 = vunpack.c.l.b16 %v77
  %v138 = vunpack.c.l.b16 %v78
  %v139 = vunpack.c.l.b16 %v79
  %v140 = vunpack.c.l.b16 %v80
  %v141 = vunpack.c.l.b16 %v81
  %v142 = vunpack.c.l.b16 %v82
  %v143 = vunpack.c.l.b16 %v83
  %v144 = vunpack.c.l.b16 %v84
  %v145 = vpack.c.b16 %v130, %v129
  %v146 = vpack.c.b16 %v132, %v131
  %v147 = vpack.c.b16 %v134, %v133
  %v148 = vpack.c.b16 %v136, %v135
  %v149 = vpack.c.b16 %v138, %v137
  %v150 = vpack.c.b16 %v140, %v139
  %v151 = vpack.c.b16 %v142, %v141
  %v152 = vpack.c.b16 %v144, %v143
  %161 = vmatprep.subr.bf16.mxu0 0
  %162 = vmatpush1.bf16.msra.mxu0 %v145
  %163 = vmatprep.subr.bf16.mxu0 0
  %164 = vmatpush1.bf16.msra.mxu0 %v146
  %165 = vmatprep.subr.bf16.mxu0 0
  %166 = vmatpush1.bf16.msra.mxu0 %v147
  %167 = vmatprep.subr.bf16.mxu0 0
  %168 = vmatpush1.bf16.msra.mxu0 %v148
  %169 = vmatprep.subr.bf16.mxu0 0
  %170 = vmatpush1.bf16.msra.mxu0 %v149
  %171 = vmatprep.subr.bf16.mxu0 0
  %172 = vmatpush1.bf16.msra.mxu0 %v150
  %173 = vmatprep.subr.bf16.mxu0 0
  %174 = vmatpush1.bf16.msra.mxu0 %v151
  %175 = vmatprep.subr.bf16.mxu0 0
  %176 = vmatpush1.bf16.msra.mxu0 %v152
  %177 = vmatprep.subr.bf16.mxu0 0
  %178 = vmatpush1.bf16.msra.mxu0 0
  %179 = vmatprep.subr.bf16.mxu0 0
  %180 = vmatpush1.bf16.msra.mxu0 0
  %181 = vmatprep.subr.bf16.mxu0 0
  %182 = vmatpush1.bf16.msra.mxu0 0
  %183 = vmatprep.subr.bf16.mxu0 0
  %184 = vmatpush1.bf16.msra.mxu0 0
  %185 = vmatprep.subr.bf16.mxu0 0
  %186 = vmatpush1.bf16.msra.mxu0 0
  %187 = vmatprep.subr.bf16.mxu0 0
  %188 = vmatpush1.bf16.msra.mxu0 0
  %189 = vmatprep.subr.bf16.mxu0 0
  %190 = vmatpush1.bf16.msra.mxu0 0
  %191 = vmatprep.subr.bf16.mxu0 0
  %192 = vmatpush1.bf16.msra.mxu0 0
  %193 = vmatprep.mubr.bf16.mxu0 0
  %194 = vmatmul.mubr.bf16.gmra.mrb[0].mxu0 %v103
  %v195 = vpop.f32.mrb[0].mxu0
  %v196 = vadd.f32 0.0, %v195
  %v197 = vpop.f32.mrb[0].mxu0
  %v198 = vpop.f32.mrb[0].mxu0
  %v199 = vadd.f32 0.0, %v198
  %v200 = vpop.f32.mrb[0].mxu0
  %201 = vmatprep.mubr.bf16.mxu0 0
  %202 = vmatmul.mubr.bf16.gmra.mrb[0].mxu0 %v104
  %v203 = vpop.f32.mrb[0].mxu0
  %v204 = vadd.f32 0.0, %v203
  %v205 = vpop.f32.mrb[0].mxu0
  %v206 = vpop.f32.mrb[0].mxu0
  %v207 = vadd.f32 0.0, %v206
  %v208 = vpop.f32.mrb[0].mxu0
  %209 = vmatprep.mubr.bf16.mxu0 0
  %210 = vmatmul.mubr.bf16.gmra.mrb[0].mxu0 %v105
  %v211 = vpop.f32.mrb[0].mxu0
  %v212 = vadd.f32 0.0, %v211
  %v213 = vpop.f32.mrb[0].mxu0
  %v214 = vpop.f32.mrb[0].mxu0
  %v215 = vadd.f32 0.0, %v214
  %v216 = vpop.f32.mrb[0].mxu0
  %217 = vmatprep.mubr.bf16.mxu0 0
  %218 = vmatmul.mubr.bf16.gmra.mrb[0].mxu0 %v106
  %v219 = vpop.f32.mrb[0].mxu0
  %v220 = vadd.f32 0.0, %v219
  %v221 = vpop.f32.mrb[0].mxu0
  %v222 = vpop.f32.mrb[0].mxu0
  %v223 = vadd.f32 0.0, %v222
  %v224 = vpop.f32.mrb[0].mxu0
  %225 = vmatprep.mubr.bf16.mxu0 0
  %226 = vmatmul.mubr.bf16.gmra.mrb[0].mxu0 %v107
  %v227 = vpop.f32.mrb[0].mxu0
  %v228 = vadd.f32 0.0, %v227
  %v229 = vpop.f32.mrb[0].mxu0
  %v230 = vpop.f32.mrb[0].mxu0
  %v231 = vpop.f32.mrb[0].mxu0
  %232 = vdwg.mxu0
  %v242 = vunpack.c.l.b16 %v33
  %v243 = vunpack.c.l.b16 %v34
  %v244 = vunpack.c.l.b16 %v35
  %v245 = vunpack.c.l.b16 %v36
  %v246 = vunpack.c.l.b16 %v37
  %v247 = vunpack.c.l.b16 %v38
  %v248 = vunpack.c.l.b16 %v39
  %v249 = vunpack.c.l.b16 %v40
  %v250 = vunpack.c.l.b16 %v41
  %v251 = vpack.c.b16 %v243, %v242
  %v252 = vpack.c.b16 %v245, %v244
  %v253 = vpack.c.b16 %v247, %v246
  %v254 = vpack.c.b16 %v249, %v248
  %v255 = vpack.c.b16 %v250, %v250
  %v277 = vunpack.c.l.b16 %v42
  %v278 = vunpack.c.l.b16 %v43
  %v279 = vunpack.c.l.b16 %v44
  %v280 = vunpack.c.l.b16 %v45
  %v281 = vunpack.c.l.b16 %v46
  %v282 = vunpack.c.l.b16 %v47
  %v283 = vunpack.c.l.b16 %v48
  %v284 = vunpack.c.l.b16 %v49
  %v285 = vunpack.c.l.b16 %v50
  %v286 = vunpack.c.l.b16 %v51
  %v287 = vunpack.c.l.b16 %v52
  %v288 = vunpack.c.l.b16 %v53
  %v289 = vunpack.c.l.b16 %v54
  %v290 = vunpack.c.l.b16 %v55
  %v291 = vunpack.c.l.b16 %v56
  %v292 = vunpack.c.l.b16 %v57
  %v293 = vpack.c.b16 %v278, %v277
  %v294 = vpack.c.b16 %v280, %v279
  %v295 = vpack.c.b16 %v282, %v281
  %v296 = vpack.c.b16 %v284, %v283
  %v297 = vpack.c.b16 %v286, %v285
  %v298 = vpack.c.b16 %v288, %v287
  %v299 = vpack.c.b16 %v290, %v289
  %v300 = vpack.c.b16 %v292, %v291
  %309 = vmatprep.subr.bf16.mxu0 0
  %310 = vmatpush1.bf16.msra.mxu0 %v293
  %311 = vmatprep.subr.bf16.mxu0 0
  %312 = vmatpush1.bf16.msra.mxu0 %v294
  %313 = vmatprep.subr.bf16.mxu0 0
  %314 = vmatpush1.bf16.msra.mxu0 %v295
  %315 = vmatprep.subr.bf16.mxu0 0
  %316 = vmatpush1.bf16.msra.mxu0 %v296
  %317 = vmatprep.subr.bf16.mxu0 0
  %318 = vmatpush1.bf16.msra.mxu0 %v297
  %319 = vmatprep.subr.bf16.mxu0 0
  %320 = vmatpush1.bf16.msra.mxu0 %v298
  %321 = vmatprep.subr.bf16.mxu0 0
  %322 = vmatpush1.bf16.msra.mxu0 %v299
  %323 = vmatprep.subr.bf16.mxu0 0
  %324 = vmatpush1.bf16.msra.mxu0 %v300
  %325 = vmatprep.subr.bf16.mxu0 0
  %326 = vmatpush1.bf16.msra.mxu0 0
  %327 = vmatprep.subr.bf16.mxu0 0
  %328 = vmatpush1.bf16.msra.mxu0 0
  %329 = vmatprep.subr.bf16.mxu0 0
  %330 = vmatpush1.bf16.msra.mxu0 0
  %331 = vmatprep.subr.bf16.mxu0 0
  %332 = vmatpush1.bf16.msra.mxu0 0
  %333 = vmatprep.subr.bf16.mxu0 0
  %334 = vmatpush1.bf16.msra.mxu0 0
  %335 = vmatprep.subr.bf16.mxu0 0
  %336 = vmatpush1.bf16.msra.mxu0 0
  %337 = vmatprep.subr.bf16.mxu0 0
  %338 = vmatpush1.bf16.msra.mxu0 0
  %339 = vmatprep.subr.bf16.mxu0 0
  %340 = vmatpush1.bf16.msra.mxu0 0
  %341 = vmatprep.mubr.bf16.mxu0 0
  %342 = vmatmul.mubr.bf16.gmra.mrb[0].mxu0 %v251
  %v343 = vpop.f32.mrb[0].mxu0
  %v344 = vadd.f32 %v196, %v343
  %v345 = vpop.f32.mrb[0].mxu0
  %v346 = vpop.f32.mrb[0].mxu0
  %v347 = vadd.f32 %v199, %v346
  %v348 = vpop.f32.mrb[0].mxu0
  %349 = vmatprep.mubr.bf16.mxu0 0
  %350 = vmatmul.mubr.bf16.gmra.mrb[0].mxu0 %v252
  %v351 = vpop.f32.mrb[0].mxu0
  %v352 = vadd.f32 %v204, %v351
  %v353 = vpop.f32.mrb[0].mxu0
  %v354 = vpop.f32.mrb[0].mxu0
  %v355 = vadd.f32 %v207, %v354
  %v356 = vpop.f32.mrb[0].mxu0
  %357 = vmatprep.mubr.bf16.mxu0 0
  %358 = vmatmul.mubr.bf16.gmra.mrb[0].mxu0 %v253
  %v359 = vpop.f32.mrb[0].mxu0
  %v360 = vadd.f32 %v212, %v359
  %v361 = vpop.f32.mrb[0].mxu0
  %v362 = vpop.f32.mrb[0].mxu0
  %v363 = vadd.f32 %v215, %v362
  %v364 = vpop.f32.mrb[0].mxu0
  %365 = vmatprep.mubr.bf16.mxu0 0
  %366 = vmatmul.mubr.bf16.gmra.mrb[0].mxu0 %v254
  %v367 = vpop.f32.mrb[0].mxu0
  %v368 = vadd.f32 %v220, %v367
  %v369 = vpop.f32.mrb[0].mxu0
  %v370 = vpop.f32.mrb[0].mxu0
  %v371 = vadd.f32 %v223, %v370
  %v372 = vpop.f32.mrb[0].mxu0
  %373 = vmatprep.mubr.bf16.mxu0 0
  %374 = vmatmul.mubr.bf16.gmra.mrb[0].mxu0 %v255
  %v375 = vpop.f32.mrb[0].mxu0
  %v376 = vadd.f32 %v228, %v375
  %v377 = vpop.f32.mrb[0].mxu0
  %v378 = vpop.f32.mrb[0].mxu0
  %v379 = vpop.f32.mrb[0].mxu0
  %380 = vdwg.mxu0
  %s381 = scalar_lea.vmem %s0, 16
  %v382 = vld [vmem:[%s381] sm:$0xf]
  %v383 = vld [vmem:[%s381 + $0x4] sm:$0xf]
  %v384 = vld [vmem:[%s381 + $0x8] sm:$0xf]
  %v385 = vld [vmem:[%s381 + $0x10] sm:$0xf]
  %v386 = vld [vmem:[%s381 + $0x14] sm:$0xf]
  %v387 = vld [vmem:[%s381 + $0x18] sm:$0xf]
  %v388 = vld [vmem:[%s381 + $0x20] sm:$0xf]
  %v389 = vld [vmem:[%s381 + $0x24] sm:$0xf]
  %v390 = vld [vmem:[%s381 + $0x28] sm:$0xf]
  %s391 = scalar_lea.vmem %s1, 128
  %v392 = vld [vmem:[%s391] sm:$0xf]
  %v393 = vld [vmem:[%s391 + $0x4] sm:$0xf]
  %v394 = vld [vmem:[%s391 + $0x8] sm:$0xf]
  %v395 = vld [vmem:[%s391 + $0xc] sm:$0xf]
  %v396 = vld [vmem:[%s391 + $0x10] sm:$0xf]
  %v397 = vld [vmem:[%s391 + $0x14] sm:$0xf]
  %v398 = vld [vmem:[%s391 + $0x18] sm:$0xf]
  %v399 = vld [vmem:[%s391 + $0x1c] sm:$0xf]
  %v400 = vld [vmem:[%s391 + $0x20] sm:$0xf]
  %v401 = vld [vmem:[%s391 + $0x24] sm:$0xf]
  %v402 = vld [vmem:[%s391 + $0x28] sm:$0xf]
  %v403 = vld [vmem:[%s391 + $0x2c] sm:$0xf]
  %v404 = vld [vmem:[%s391 + $0x30] sm:$0xf]
  %v405 = vld [vmem:[%s391 + $0x34] sm:$0xf]
  %v406 = vld [vmem:[%s391 + $0x38] sm:$0xf]
  %v407 = vld [vmem:[%s391 + $0x3c] sm:$0xf]
  %v417 = vunpack.c.l.b16 %v382
  %v418 = vunpack.c.l.b16 %v383
  %v419 = vunpack.c.l.b16 %v384
  %v420 = vunpack.c.l.b16 %v385
  %v421 = vunpack.c.l.b16 %v386
  %v422 = vunpack.c.l.b16 %v387
  %v423 = vunpack.c.l.b16 %v388
  %v424 = vunpack.c.l.b16 %v389
  %v425 = vunpack.c.l.b16 %v390
  %v426 = vpack.c.b16 %v418, %v417
  %v427 = vpack.c.b16 %v420, %v419
  %v428 = vpack.c.b16 %v422, %v421
  %v429 = vpack.c.b16 %v424, %v423
  %v430 = vpack.c.b16 %v425, %v425
  %v452 = vunpack.c.l.b16 %v392
  %v453 = vunpack.c.l.b16 %v393
  %v454 = vunpack.c.l.b16 %v394
  %v455 = vunpack.c.l.b16 %v395
  %v456 = vunpack.c.l.b16 %v396
  %v457 = vunpack.c.l.b16 %v397
  %v458 = vunpack.c.l.b16 %v398
  %v459 = vunpack.c.l.b16 %v399
  %v460 = vunpack.c.l.b16 %v400
  %v461 = vunpack.c.l.b16 %v401
  %v462 = vunpack.c.l.b16 %v402
  %v463 = vunpack.c.l.b16 %v403
  %v464 = vunpack.c.l.b16 %v404
  %v465 = vunpack.c.l.b16 %v405
  %v466 = vunpack.c.l.b16 %v406
  %v467 = vunpack.c.l.b16 %v407
  %v468 = vpack.c.b16 %v453, %v452
  %v469 = vpack.c.b16 %v455, %v454
  %v470 = vpack.c.b16 %v457, %v456
  %v471 = vpack.c.b16 %v459, %v458
  %v472 = vpack.c.b16 %v461, %v460
  %v473 = vpack.c.b16 %v463, %v462
  %v474 = vpack.c.b16 %v465, %v464
  %v475 = vpack.c.b16 %v467, %v466
  %484 = vmatprep.subr.bf16.mxu0 0
  %485 = vmatpush1.bf16.msra.mxu0 %v468
  %486 = vmatprep.subr.bf16.mxu0 0
  %487 = vmatpush1.bf16.msra.mxu0 %v469
  %488 = vmatprep.subr.bf16.mxu0 0
  %489 = vmatpush1.bf16.msra.mxu0 %v470
  %490 = vmatprep.subr.bf16.mxu0 0
  %491 = vmatpush1.bf16.msra.mxu0 %v471
  %492 = vmatprep.subr.bf16.mxu0 0
  %493 = vmatpush1.bf16.msra.mxu0 %v472
  %494 = vmatprep.subr.bf16.mxu0 0
  %495 = vmatpush1.bf16.msra.mxu0 %v473
  %496 = vmatprep.subr.bf16.mxu0 0
  %497 = vmatpush1.bf16.msra.mxu0 %v474
  %498 = vmatprep.subr.bf16.mxu0 0
  %499 = vmatpush1.bf16.msra.mxu0 %v475
  %500 = vmatprep.subr.bf16.mxu0 0
  %501 = vmatpush1.bf16.msra.mxu0 0
  %502 = vmatprep.subr.bf16.mxu0 0
  %503 = vmatpush1.bf16.msra.mxu0 0
  %504 = vmatprep.subr.bf16.mxu0 0
  %505 = vmatpush1.bf16.msra.mxu0 0
  %506 = vmatprep.subr.bf16.mxu0 0
  %507 = vmatpush1.bf16.msra.mxu0 0
  %508 = vmatprep.subr.bf16.mxu0 0
  %509 = vmatpush1.bf16.msra.mxu0 0
  %510 = vmatprep.subr.bf16.mxu0 0
  %511 = vmatpush1.bf16.msra.mxu0 0
  %512 = vmatprep.subr.bf16.mxu0 0
  %513 = vmatpush1.bf16.msra.mxu0 0
  %514 = vmatprep.subr.bf16.mxu0 0
  %515 = vmatpush1.bf16.msra.mxu0 0
  %516 = vmatprep.mubr.bf16.mxu0 0
  %517 = vmatmul.mubr.bf16.gmra.mrb[0].mxu0 %v426
  %v518 = vpop.f32.mrb[0].mxu0
  %v519 = vadd.f32 0.0, %v518
  %v520 = vpop.f32.mrb[0].mxu0
  %v521 = vpop.f32.mrb[0].mxu0
  %v522 = vadd.f32 0.0, %v521
  %v523 = vpop.f32.mrb[0].mxu0
  %524 = vmatprep.mubr.bf16.mxu0 0
  %525 = vmatmul.mubr.bf16.gmra.mrb[0].mxu0 %v427
  %v526 = vpop.f32.mrb[0].mxu0
  %v527 = vadd.f32 0.0, %v526
  %v528 = vpop.f32.mrb[0].mxu0
  %v529 = vpop.f32.mrb[0].mxu0
  %v530 = vadd.f32 0.0, %v529
  %v531 = vpop.f32.mrb[0].mxu0
  %532 = vmatprep.mubr.bf16.mxu0 0
  %533 = vmatmul.mubr.bf16.gmra.mrb[0].mxu0 %v428
  %v534 = vpop.f32.mrb[0].mxu0
  %v535 = vadd.f32 0.0, %v534
  %v536 = vpop.f32.mrb[0].mxu0
  %v537 = vpop.f32.mrb[0].mxu0
  %v538 = vadd.f32 0.0, %v537
  %v539 = vpop.f32.mrb[0].mxu0
  %540 = vmatprep.mubr.bf16.mxu0 0
  %541 = vmatmul.mubr.bf16.gmra.mrb[0].mxu0 %v429
  %v542 = vpop.f32.mrb[0].mxu0
  %v543 = vadd.f32 0.0, %v542
  %v544 = vpop.f32.mrb[0].mxu0
  %v545 = vpop.f32.mrb[0].mxu0
  %v546 = vadd.f32 0.0, %v545
  %v547 = vpop.f32.mrb[0].mxu0
  %548 = vmatprep.mubr.bf16.mxu0 0
  %549 = vmatmul.mubr.bf16.gmra.mrb[0].mxu0 %v430
  %v550 = vpop.f32.mrb[0].mxu0
  %v551 = vadd.f32 0.0, %v550
  %v552 = vpop.f32.mrb[0].mxu0
  %v553 = vpop.f32.mrb[0].mxu0
  %v554 = vpop.f32.mrb[0].mxu0
  %555 = vdwg.mxu0
  %v556 = vadd.f32 %v344, %v519
  %v557 = vadd.f32 %v347, %v522
  %v558 = vadd.f32 %v352, %v527
  %v559 = vadd.f32 %v355, %v530
  %v560 = vadd.f32 %v360, %v535
  %v561 = vadd.f32 %v363, %v538
  %v562 = vadd.f32 %v368, %v543
  %v563 = vadd.f32 %v371, %v546
  %v564 = vadd.f32 %v376, %v551
  %s565 = scalar_lea.vmem %s0, 20
  %v566 = vld [vmem:[%s565] sm:$0xf]
  %v567 = vld [vmem:[%s565 + $0x4] sm:$0xf]
  %v568 = vld [vmem:[%s565 + $0x8] sm:$0xf]
  %v569 = vld [vmem:[%s565 + $0x10] sm:$0xf]
  %v570 = vld [vmem:[%s565 + $0x14] sm:$0xf]
  %v571 = vld [vmem:[%s565 + $0x18] sm:$0xf]
  %v572 = vld [vmem:[%s565 + $0x20] sm:$0xf]
  %v573 = vld [vmem:[%s565 + $0x24] sm:$0xf]
  %v574 = vld [vmem:[%s565 + $0x28] sm:$0xf]
  %s575 = scalar_lea.vmem %s1, 192
  %v576 = vld [vmem:[%s575] sm:$0xf]
  %v577 = vld [vmem:[%s575 + $0x4] sm:$0xf]
  %v578 = vld [vmem:[%s575 + $0x8] sm:$0xf]
  %v579 = vld [vmem:[%s575 + $0xc] sm:$0xf]
  %v580 = vld [vmem:[%s575 + $0x10] sm:$0xf]
  %v581 = vld [vmem:[%s575 + $0x14] sm:$0xf]
  %v582 = vld [vmem:[%s575 + $0x18] sm:$0xf]
  %v583 = vld [vmem:[%s575 + $0x1c] sm:$0xf]
  %v584 = vld [vmem:[%s575 + $0x20] sm:$0xf]
  %v585 = vld [vmem:[%s575 + $0x24] sm:$0xf]
  %v586 = vld [vmem:[%s575 + $0x28] sm:$0xf]
  %v587 = vld [vmem:[%s575 + $0x2c] sm:$0xf]
  %v588 = vld [vmem:[%s575 + $0x30] sm:$0xf]
  %v589 = vld [vmem:[%s575 + $0x34] sm:$0xf]
  %v590 = vld [vmem:[%s575 + $0x38] sm:$0xf]
  %v591 = vld [vmem:[%s575 + $0x3c] sm:$0xf]
  %v601 = vunpack.c.l.b16 %v566
  %v602 = vunpack.c.l.b16 %v567
  %v603 = vunpack.c.l.b16 %v568
  %v604 = vunpack.c.l.b16 %v569
  %v605 = vunpack.c.l.b16 %v570
  %v606 = vunpack.c.l.b16 %v571
  %v607 = vunpack.c.l.b16 %v572
  %v608 = vunpack.c.l.b16 %v573
  %v609 = vunpack.c.l.b16 %v574
  %v610 = vpack.c.b16 %v602, %v601
  %v611 = vpack.c.b16 %v604, %v603
  %v612 = vpack.c.b16 %v606, %v605
  %v613 = vpack.c.b16 %v608, %v607
  %v614 = vpack.c.b16 %v609, %v609
  %v636 = vunpack.c.l.b16 %v576
  %v637 = vunpack.c.l.b16 %v577
  %v638 = vunpack.c.l.b16 %v578
  %v639 = vunpack.c.l.b16 %v579
  %v640 = vunpack.c.l.b16 %v580
  %v641 = vunpack.c.l.b16 %v581
  %v642 = vunpack.c.l.b16 %v582
  %v643 = vunpack.c.l.b16 %v583
  %v644 = vunpack.c.l.b16 %v584
  %v645 = vunpack.c.l.b16 %v585
  %v646 = vunpack.c.l.b16 %v586
  %v647 = vunpack.c.l.b16 %v587
  %v648 = vunpack.c.l.b16 %v588
  %v649 = vunpack.c.l.b16 %v589
  %v650 = vunpack.c.l.b16 %v590
  %v651 = vunpack.c.l.b16 %v591
  %v652 = vpack.c.b16 %v637, %v636
  %v653 = vpack.c.b16 %v639, %v638
  %v654 = vpack.c.b16 %v641, %v640
  %v655 = vpack.c.b16 %v643, %v642
  %v656 = vpack.c.b16 %v645, %v644
  %v657 = vpack.c.b16 %v647, %v646
  %v658 = vpack.c.b16 %v649, %v648
  %v659 = vpack.c.b16 %v651, %v650
  %668 = vmatprep.subr.bf16.mxu0 0
  %669 = vmatpush1.bf16.msra.mxu0 %v652
  %670 = vmatprep.subr.bf16.mxu0 0
  %671 = vmatpush1.bf16.msra.mxu0 %v653
  %672 = vmatprep.subr.bf16.mxu0 0
  %673 = vmatpush1.bf16.msra.mxu0 %v654
  %674 = vmatprep.subr.bf16.mxu0 0
  %675 = vmatpush1.bf16.msra.mxu0 %v655
  %676 = vmatprep.subr.bf16.mxu0 0
  %677 = vmatpush1.bf16.msra.mxu0 %v656
  %678 = vmatprep.subr.bf16.mxu0 0
  %679 = vmatpush1.bf16.msra.mxu0 %v657
  %680 = vmatprep.subr.bf16.mxu0 0
  %681 = vmatpush1.bf16.msra.mxu0 %v658
  %682 = vmatprep.subr.bf16.mxu0 0
  %683 = vmatpush1.bf16.msra.mxu0 %v659
  %684 = vmatprep.subr.bf16.mxu0 0
  %685 = vmatpush1.bf16.msra.mxu0 0
  %686 = vmatprep.subr.bf16.mxu0 0
  %687 = vmatpush1.bf16.msra.mxu0 0
  %688 = vmatprep.subr.bf16.mxu0 0
  %689 = vmatpush1.bf16.msra.mxu0 0
  %690 = vmatprep.subr.bf16.mxu0 0
  %691 = vmatpush1.bf16.msra.mxu0 0
  %692 = vmatprep.subr.bf16.mxu0 0
  %693 = vmatpush1.bf16.msra.mxu0 0
  %694 = vmatprep.subr.bf16.mxu0 0
  %695 = vmatpush1.bf16.msra.mxu0 0
  %696 = vmatprep.subr.bf16.mxu0 0
  %697 = vmatpush1.bf16.msra.mxu0 0
  %698 = vmatprep.subr.bf16.mxu0 0
  %699 = vmatpush1.bf16.msra.mxu0 0
  %700 = vmatprep.mubr.bf16.mxu0 0
  %701 = vmatmul.mubr.bf16.gmra.mrb[0].mxu0 %v610
  %v702 = vpop.f32.mrb[0].mxu0
  %v703 = vadd.f32 0.0, %v702
  %v704 = vpop.f32.mrb[0].mxu0
  %v705 = vpop.f32.mrb[0].mxu0
  %v706 = vadd.f32 0.0, %v705
  %v707 = vpop.f32.mrb[0].mxu0
  %708 = vmatprep.mubr.bf16.mxu0 0
  %709 = vmatmul.mubr.bf16.gmra.mrb[0].mxu0 %v611
  %v710 = vpop.f32.mrb[0].mxu0
  %v711 = vadd.f32 0.0, %v710
  %v712 = vpop.f32.mrb[0].mxu0
  %v713 = vpop.f32.mrb[0].mxu0
  %v714 = vadd.f32 0.0, %v713
  %v715 = vpop.f32.mrb[0].mxu0
  %716 = vmatprep.mubr.bf16.mxu0 0
  %717 = vmatmul.mubr.bf16.gmra.mrb[0].mxu0 %v612
  %v718 = vpop.f32.mrb[0].mxu0
  %v719 = vadd.f32 0.0, %v718
  %v720 = vpop.f32.mrb[0].mxu0
  %v721 = vpop.f32.mrb[0].mxu0
  %v722 = vadd.f32 0.0, %v721
  %v723 = vpop.f32.mrb[0].mxu0
  %724 = vmatprep.mubr.bf16.mxu0 0
  %725 = vmatmul.mubr.bf16.gmra.mrb[0].mxu0 %v613
  %v726 = vpop.f32.mrb[0].mxu0
  %v727 = vadd.f32 0.0, %v726
  %v728 = vpop.f32.mrb[0].mxu0
  %v729 = vpop.f32.mrb[0].mxu0
  %v730 = vadd.f32 0.0, %v729
  %v731 = vpop.f32.mrb[0].mxu0
  %732 = vmatprep.mubr.bf16.mxu0 0
  %733 = vmatmul.mubr.bf16.gmra.mrb[0].mxu0 %v614
  %v734 = vpop.f32.mrb[0].mxu0
  %v735 = vadd.f32 0.0, %v734
  %v736 = vpop.f32.mrb[0].mxu0
  %v737 = vpop.f32.mrb[0].mxu0
  %v738 = vpop.f32.mrb[0].mxu0
  %739 = vdwg.mxu0
  %v740 = vadd.f32 %v556, %v703
  %v741 = vadd.f32 %v557, %v706
  %v742 = vadd.f32 %v558, %v711
  %v743 = vadd.f32 %v559, %v714
  %v744 = vadd.f32 %v560, %v719
  %v745 = vadd.f32 %v561, %v722
  %v746 = vadd.f32 %v562, %v727
  %v747 = vadd.f32 %v563, %v730
  %v748 = vadd.f32 %v564, %v735
  %v749 = vld [vmem:[%s2] sm:$0x1]
  %v751 = vlaneseq
  %v752 = vshrl.u32 %v751, 7
  %v753 = vsub.s32 0, %v752
  %v754 = vrot.slane %v749, %v753
  %v756 = vadd.f32 %v740, %v754
  %v757 = vadd.f32 %v741, %v754
  %v758 = vadd.f32 %v742, %v754
  %v759 = vadd.f32 %v743, %v754
  %v760 = vadd.f32 %v744, %v754
  %v761 = vadd.f32 %v745, %v754
  %v762 = vadd.f32 %v746, %v754
  %v763 = vadd.f32 %v747, %v754
  %v764 = vadd.f32 %v748, %v754
  %v765 = vmax.f32 %v756, 0.0
  %v766 = vmax.f32 %v757, 0.0
  %v767 = vmax.f32 %v758, 0.0
  %v768 = vmax.f32 %v759, 0.0
  %v769 = vmax.f32 %v760, 0.0
  %v770 = vmax.f32 %v761, 0.0
  %v771 = vmax.f32 %v762, 0.0
  %v772 = vmax.f32 %v763, 0.0
  %v773 = vmax.f32 %v764, 0.0
  %v774 = vpack.c.bf16 %v766, %v765
  %v775 = vpack.c.bf16 %v768, %v767
  %v776 = vpack.c.bf16 %v770, %v769
  %v777 = vpack.c.bf16 %v772, %v771
  %v778 = vpack.c.bf16 %v773, %v773
  %v784 = vunpack.c.l.b16 %v774
  %v785 = vunpack.c.h.b16 %v774
  %v786 = vunpack.c.l.b16 %v775
  %v787 = vunpack.c.h.b16 %v775
  %v788 = vunpack.c.l.b16 %v776
  %v789 = vunpack.c.h.b16 %v776
  %v790 = vunpack.c.l.b16 %v777
  %v791 = vunpack.c.h.b16 %v777
  %v792 = vunpack.c.l.b16 %v778
  %v793 = vpack.c.b16 %v784, %v784
  %v794 = vpack.c.b16 %v785, %v785
  %v795 = vpack.c.b16 %v786, %v786
  %v796 = vpack.c.b16 %v787, %v787
  %v797 = vpack.c.b16 %v788, %v788
  %v798 = vpack.c.b16 %v789, %v789
  %v799 = vpack.c.b16 %v790, %v790
  %v800 = vpack.c.b16 %v791, %v791
  %v801 = vpack.c.b16 %v792, %v792
  %vm811 = vcmask 519168
  %812 = vst.msk [vmem:[#allocation2] sm:$0xf] %vm811, %v793
  %813 = vst.msk [vmem:[#allocation2 + $0x4] sm:$0xf] %vm811, %v794
  %814 = vst.msk [vmem:[#allocation2 + $0x8] sm:$0xf] %vm811, %v795
  %815 = vst.msk [vmem:[#allocation2 + $0xc] sm:$0xf] %vm811, %v796
  %816 = vst.msk [vmem:[#allocation2 + $0x10] sm:$0xf] %vm811, %v797
  %817 = vst.msk [vmem:[#allocation2 + $0x14] sm:$0xf] %vm811, %v798
  %818 = vst.msk [vmem:[#allocation2 + $0x18] sm:$0xf] %vm811, %v799
  %819 = vst.msk [vmem:[#allocation2 + $0x1c] sm:$0xf] %vm811, %v800
  %820 = vst.msk [vmem:[#allocation2 + $0x20] sm:$0xf] %vm811, %v801
  %v821 = vld [vmem:[#allocation2] sm:$0xf]
  %v822 = vld [vmem:[%s3] sm:$0xf]
  %v823 = vld [vmem:[%s3 + $0x4] sm:$0xf]
  %v824 = vld [vmem:[%s3 + $0x8] sm:$0xf]
  %v825 = vld [vmem:[%s3 + $0xc] sm:$0xf]
  %v826 = vld [vmem:[%s3 + $0x10] sm:$0xf]
  %v827 = vld [vmem:[%s3 + $0x14] sm:$0xf]
  %v828 = vld [vmem:[%s3 + $0x18] sm:$0xf]
  %v829 = vld [vmem:[%s3 + $0x1c] sm:$0xf]
  %s830 = scalar_lea.vmem [#allocation2], 4
  %v831 = vld [vmem:[%s830] sm:$0xf]
  %s832 = scalar_lea.vmem %s3, 32
  %v833 = vld [vmem:[%s832] sm:$0xf]
  %v834 = vld [vmem:[%s832 + $0x4] sm:$0xf]
  %v835 = vld [vmem:[%s832 + $0x8] sm:$0xf]
  %v836 = vld [vmem:[%s832 + $0xc] sm:$0xf]
  %v837 = vld [vmem:[%s832 + $0x10] sm:$0xf]
  %v838 = vld [vmem:[%s832 + $0x14] sm:$0xf]
  %v839 = vld [vmem:[%s832 + $0x18] sm:$0xf]
  %v840 = vld [vmem:[%s832 + $0x1c] sm:$0xf]
  %v849 = vunpack.c.l.b16 %v833
  %v850 = vunpack.c.l.b16 %v834
  %v851 = vunpack.c.l.b16 %v835
  %v852 = vunpack.c.l.b16 %v836
  %v853 = vunpack.c.l.b16 %v837
  %v854 = vunpack.c.l.b16 %v838
  %v855 = vunpack.c.l.b16 %v839
  %v856 = vunpack.c.l.b16 %v840
  %v857 = vpack.c.b16 %v850, %v849
  %v858 = vpack.c.b16 %v852, %v851
  %v859 = vpack.c.b16 %v854, %v853
  %v860 = vpack.c.b16 %v856, %v855
  %vm865 = vcmask 523264
  %v867 = vsel %vm865, %v831, 0
  %869 = vmatprep.subr.bf16.mxu0 0
  %870 = vmatpush1.bf16.msra.mxu0 %v857
  %871 = vmatprep.subr.bf16.mxu0 0
  %872 = vmatpush1.bf16.msra.mxu0 %v858
  %873 = vmatprep.subr.bf16.mxu0 0
  %874 = vmatpush1.bf16.msra.mxu0 %v859
  %875 = vmatprep.subr.bf16.mxu0 0
  %876 = vmatpush1.bf16.msra.mxu0 %v860
  %877 = vmatprep.subr.bf16.mxu0 0
  %878 = vmatpush1.bf16.msra.mxu0 0
  %879 = vmatprep.subr.bf16.mxu0 0
  %880 = vmatpush1.bf16.msra.mxu0 0
  %881 = vmatprep.subr.bf16.mxu0 0
  %882 = vmatpush1.bf16.msra.mxu0 0
  %883 = vmatprep.subr.bf16.mxu0 0
  %884 = vmatpush1.bf16.msra.mxu0 0
  %885 = vmatprep.subr.bf16.mxu0 0
  %886 = vmatpush1.bf16.msra.mxu0 0
  %887 = vmatprep.subr.bf16.mxu0 0
  %888 = vmatpush1.bf16.msra.mxu0 0
  %889 = vmatprep.subr.bf16.mxu0 0
  %890 = vmatpush1.bf16.msra.mxu0 0
  %891 = vmatprep.subr.bf16.mxu0 0
  %892 = vmatpush1.bf16.msra.mxu0 0
  %893 = vmatprep.subr.bf16.mxu0 0
  %894 = vmatpush1.bf16.msra.mxu0 0
  %895 = vmatprep.subr.bf16.mxu0 0
  %896 = vmatpush1.bf16.msra.mxu0 0
  %897 = vmatprep.subr.bf16.mxu0 0
  %898 = vmatpush1.bf16.msra.mxu0 0
  %899 = vmatprep.subr.bf16.mxu0 0
  %900 = vmatpush1.bf16.msra.mxu0 0
  %901 = vmatprep.mubr.bf16.mxu0 0
  %902 = vmatmul.mubr.bf16.gmra.mrb[0].mxu0 %v867
  %v903 = vpop.f32.mrb[0].mxu0
  %v904 = vadd.f32 0.0, %v903
  %v905 = vpop.f32.mrb[0].mxu0
  %v906 = vpop.f32.mrb[0].mxu0
  %v907 = vpop.f32.mrb[0].mxu0
  %908 = vdwg.mxu0
  %v917 = vunpack.c.l.b16 %v822
  %v918 = vunpack.c.l.b16 %v823
  %v919 = vunpack.c.l.b16 %v824
  %v920 = vunpack.c.l.b16 %v825
  %v921 = vunpack.c.l.b16 %v826
  %v922 = vunpack.c.l.b16 %v827
  %v923 = vunpack.c.l.b16 %v828
  %v924 = vunpack.c.l.b16 %v829
  %v925 = vpack.c.b16 %v918, %v917
  %v926 = vpack.c.b16 %v920, %v919
  %v927 = vpack.c.b16 %v922, %v921
  %v928 = vpack.c.b16 %v924, %v923
  %v934 = vsel %vm865, %v821, 0
  %936 = vmatprep.subr.bf16.mxu0 0
  %937 = vmatpush1.bf16.msra.mxu0 %v925
  %938 = vmatprep.subr.bf16.mxu0 0
  %939 = vmatpush1.bf16.msra.mxu0 %v926
  %940 = vmatprep.subr.bf16.mxu0 0
  %941 = vmatpush1.bf16.msra.mxu0 %v927
  %942 = vmatprep.subr.bf16.mxu0 0
  %943 = vmatpush1.bf16.msra.mxu0 %v928
  %944 = vmatprep.subr.bf16.mxu0 0
  %945 = vmatpush1.bf16.msra.mxu0 0
  %946 = vmatprep.subr.bf16.mxu0 0
  %947 = vmatpush1.bf16.msra.mxu0 0
  %948 = vmatprep.subr.bf16.mxu0 0
  %949 = vmatpush1.bf16.msra.mxu0 0
  %950 = vmatprep.subr.bf16.mxu0 0
  %951 = vmatpush1.bf16.msra.mxu0 0
  %952 = vmatprep.subr.bf16.mxu0 0
  %953 = vmatpush1.bf16.msra.mxu0 0
  %954 = vmatprep.subr.bf16.mxu0 0
  %955 = vmatpush1.bf16.msra.mxu0 0
  %956 = vmatprep.subr.bf16.mxu0 0
  %957 = vmatpush1.bf16.msra.mxu0 0
  %958 = vmatprep.subr.bf16.mxu0 0
  %959 = vmatpush1.bf16.msra.mxu0 0
  %960 = vmatprep.subr.bf16.mxu0 0
  %961 = vmatpush1.bf16.msra.mxu0 0
  %962 = vmatprep.subr.bf16.mxu0 0
  %963 = vmatpush1.bf16.msra.mxu0 0
  %964 = vmatprep.subr.bf16.mxu0 0
  %965 = vmatpush1.bf16.msra.mxu0 0
  %966 = vmatprep.subr.bf16.mxu0 0
  %967 = vmatpush1.bf16.msra.mxu0 0
  %968 = vmatprep.mubr.bf16.mxu0 0
  %969 = vmatmul.mubr.bf16.gmra.mrb[0].mxu0 %v934
  %v970 = vpop.f32.mrb[0].mxu0
  %v971 = vadd.f32 %v904, %v970
  %v972 = vpop.f32.mrb[0].mxu0
  %v973 = vpop.f32.mrb[0].mxu0
  %v974 = vpop.f32.mrb[0].mxu0
  %975 = vdwg.mxu0
  %s976 = scalar_lea.vmem [#allocation2], 8
  %v977 = vld [vmem:[%s976] sm:$0xf]
  %s978 = scalar_lea.vmem %s3, 64
  %v979 = vld [vmem:[%s978] sm:$0xf]
  %v980 = vld [vmem:[%s978 + $0x4] sm:$0xf]
  %v981 = vld [vmem:[%s978 + $0x8] sm:$0xf]
  %v982 = vld [vmem:[%s978 + $0xc] sm:$0xf]
  %v983 = vld [vmem:[%s978 + $0x10] sm:$0xf]
  %v984 = vld [vmem:[%s978 + $0x14] sm:$0xf]
  %v985 = vld [vmem:[%s978 + $0x18] sm:$0xf]
  %v986 = vld [vmem:[%s978 + $0x1c] sm:$0xf]
  %v995 = vunpack.c.l.b16 %v979
  %v996 = vunpack.c.l.b16 %v980
  %v997 = vunpack.c.l.b16 %v981
  %v998 = vunpack.c.l.b16 %v982
  %v999 = vunpack.c.l.b16 %v983
  %v1000 = vunpack.c.l.b16 %v984
  %v1001 = vunpack.c.l.b16 %v985
  %v1002 = vunpack.c.l.b16 %v986
  %v1003 = vpack.c.b16 %v996, %v995
  %v1004 = vpack.c.b16 %v998, %v997
  %v1005 = vpack.c.b16 %v1000, %v999
  %v1006 = vpack.c.b16 %v1002, %v1001
  %v1012 = vsel %vm865, %v977, 0
  %1014 = vmatprep.subr.bf16.mxu0 0
  %1015 = vmatpush1.bf16.msra.mxu0 %v1003
  %1016 = vmatprep.subr.bf16.mxu0 0
  %1017 = vmatpush1.bf16.msra.mxu0 %v1004
  %1018 = vmatprep.subr.bf16.mxu0 0
  %1019 = vmatpush1.bf16.msra.mxu0 %v1005
  %1020 = vmatprep.subr.bf16.mxu0 0
  %1021 = vmatpush1.bf16.msra.mxu0 %v1006
  %1022 = vmatprep.subr.bf16.mxu0 0
  %1023 = vmatpush1.bf16.msra.mxu0 0
  %1024 = vmatprep.subr.bf16.mxu0 0
  %1025 = vmatpush1.bf16.msra.mxu0 0
  %1026 = vmatprep.subr.bf16.mxu0 0
  %1027 = vmatpush1.bf16.msra.mxu0 0
  %1028 = vmatprep.subr.bf16.mxu0 0
  %1029 = vmatpush1.bf16.msra.mxu0 0
  %1030 = vmatprep.subr.bf16.mxu0 0
  %1031 = vmatpush1.bf16.msra.mxu0 0
  %1032 = vmatprep.subr.bf16.mxu0 0
  %1033 = vmatpush1.bf16.msra.mxu0 0
  %1034 = vmatprep.subr.bf16.mxu0 0
  %1035 = vmatpush1.bf16.msra.mxu0 0
  %1036 = vmatprep.subr.bf16.mxu0 0
  %1037 = vmatpush1.bf16.msra.mxu0 0
  %1038 = vmatprep.subr.bf16.mxu0 0
  %1039 = vmatpush1.bf16.msra.mxu0 0
  %1040 = vmatprep.subr.bf16.mxu0 0
  %1041 = vmatpush1.bf16.msra.mxu0 0
  %1042 = vmatprep.subr.bf16.mxu0 0
  %1043 = vmatpush1.bf16.msra.mxu0 0
  %1044 = vmatprep.subr.bf16.mxu0 0
  %1045 = vmatpush1.bf16.msra.mxu0 0
  %1046 = vmatprep.mubr.bf16.mxu0 0
  %1047 = vmatmul.mubr.bf16.gmra.mrb[0].mxu0 %v1012
  %v1048 = vpop.f32.mrb[0].mxu0
  %v1049 = vadd.f32 0.0, %v1048
  %v1050 = vpop.f32.mrb[0].mxu0
  %v1051 = vpop.f32.mrb[0].mxu0
  %v1052 = vpop.f32.mrb[0].mxu0
  %1053 = vdwg.mxu0
  %v1054 = vadd.f32 %v971, %v1049
  %s1055 = scalar_lea.vmem [#allocation2], 12
  %v1056 = vld [vmem:[%s1055] sm:$0xf]
  %s1057 = scalar_lea.vmem %s3, 96
  %v1058 = vld [vmem:[%s1057] sm:$0xf]
  %v1059 = vld [vmem:[%s1057 + $0x4] sm:$0xf]
  %v1060 = vld [vmem:[%s1057 + $0x8] sm:$0xf]
  %v1061 = vld [vmem:[%s1057 + $0xc] sm:$0xf]
  %v1062 = vld [vmem:[%s1057 + $0x10] sm:$0xf]
  %v1063 = vld [vmem:[%s1057 + $0x14] sm:$0xf]
  %v1064 = vld [vmem:[%s1057 + $0x18] sm:$0xf]
  %v1065 = vld [vmem:[%s1057 + $0x1c] sm:$0xf]
  %v1074 = vunpack.c.l.b16 %v1058
  %v1075 = vunpack.c.l.b16 %v1059
  %v1076 = vunpack.c.l.b16 %v1060
  %v1077 = vunpack.c.l.b16 %v1061
  %v1078 = vunpack.c.l.b16 %v1062
  %v1079 = vunpack.c.l.b16 %v1063
  %v1080 = vunpack.c.l.b16 %v1064
  %v1081 = vunpack.c.l.b16 %v1065
  %v1082 = vpack.c.b16 %v1075, %v1074
  %v1083 = vpack.c.b16 %v1077, %v1076
  %v1084 = vpack.c.b16 %v1079, %v1078
  %v1085 = vpack.c.b16 %v1081, %v1080
  %v1091 = vsel %vm865, %v1056, 0
  %1093 = vmatprep.subr.bf16.mxu0 0
  %1094 = vmatpush1.bf16.msra.mxu0 %v1082
  %1095 = vmatprep.subr.bf16.mxu0 0
  %1096 = vmatpush1.bf16.msra.mxu0 %v1083
  %1097 = vmatprep.subr.bf16.mxu0 0
  %1098 = vmatpush1.bf16.msra.mxu0 %v1084
  %1099 = vmatprep.subr.bf16.mxu0 0
  %1100 = vmatpush1.bf16.msra.mxu0 %v1085
  %1101 = vmatprep.subr.bf16.mxu0 0
  %1102 = vmatpush1.bf16.msra.mxu0 0
  %1103 = vmatprep.subr.bf16.mxu0 0
  %1104 = vmatpush1.bf16.msra.mxu0 0
  %1105 = vmatprep.subr.bf16.mxu0 0
  %1106 = vmatpush1.bf16.msra.mxu0 0
  %1107 = vmatprep.subr.bf16.mxu0 0
  %1108 = vmatpush1.bf16.msra.mxu0 0
  %1109 = vmatprep.subr.bf16.mxu0 0
  %1110 = vmatpush1.bf16.msra.mxu0 0
  %1111 = vmatprep.subr.bf16.mxu0 0
  %1112 = vmatpush1.bf16.msra.mxu0 0
  %1113 = vmatprep.subr.bf16.mxu0 0
  %1114 = vmatpush1.bf16.msra.mxu0 0
  %1115 = vmatprep.subr.bf16.mxu0 0
  %1116 = vmatpush1.bf16.msra.mxu0 0
  %1117 = vmatprep.subr.bf16.mxu0 0
  %1118 = vmatpush1.bf16.msra.mxu0 0
  %1119 = vmatprep.subr.bf16.mxu0 0
  %1120 = vmatpush1.bf16.msra.mxu0 0
  %1121 = vmatprep.subr.bf16.mxu0 0
  %1122 = vmatpush1.bf16.msra.mxu0 0
  %1123 = vmatprep.subr.bf16.mxu0 0
  %1124 = vmatpush1.bf16.msra.mxu0 0
  %1125 = vmatprep.mubr.bf16.mxu0 0
  %1126 = vmatmul.mubr.bf16.gmra.mrb[0].mxu0 %v1091
  %v1127 = vpop.f32.mrb[0].mxu0
  %v1128 = vadd.f32 0.0, %v1127
  %v1129 = vpop.f32.mrb[0].mxu0
  %v1130 = vpop.f32.mrb[0].mxu0
  %v1131 = vpop.f32.mrb[0].mxu0
  %1132 = vdwg.mxu0
  %v1133 = vadd.f32 %v1054, %v1128
  %s1134 = scalar_lea.vmem [#allocation2], 16
  %v1135 = vld [vmem:[%s1134] sm:$0xf]
  %s1136 = scalar_lea.vmem %s3, 128
  %v1137 = vld [vmem:[%s1136] sm:$0xf]
  %v1138 = vld [vmem:[%s1136 + $0x4] sm:$0xf]
  %v1139 = vld [vmem:[%s1136 + $0x8] sm:$0xf]
  %v1140 = vld [vmem:[%s1136 + $0xc] sm:$0xf]
  %v1141 = vld [vmem:[%s1136 + $0x10] sm:$0xf]
  %v1142 = vld [vmem:[%s1136 + $0x14] sm:$0xf]
  %v1143 = vld [vmem:[%s1136 + $0x18] sm:$0xf]
  %v1144 = vld [vmem:[%s1136 + $0x1c] sm:$0xf]
  %v1153 = vunpack.c.l.b16 %v1137
  %v1154 = vunpack.c.l.b16 %v1138
  %v1155 = vunpack.c.l.b16 %v1139
  %v1156 = vunpack.c.l.b16 %v1140
  %v1157 = vunpack.c.l.b16 %v1141
  %v1158 = vunpack.c.l.b16 %v1142
  %v1159 = vunpack.c.l.b16 %v1143
  %v1160 = vunpack.c.l.b16 %v1144
  %v1161 = vpack.c.b16 %v1154, %v1153
  %v1162 = vpack.c.b16 %v1156, %v1155
  %v1163 = vpack.c.b16 %v1158, %v1157
  %v1164 = vpack.c.b16 %v1160, %v1159
  %v1170 = vsel %vm865, %v1135, 0
  %1172 = vmatprep.subr.bf16.mxu0 0
  %1173 = vmatpush1.bf16.msra.mxu0 %v1161
  %1174 = vmatprep.subr.bf16.mxu0 0
  %1175 = vmatpush1.bf16.msra.mxu0 %v1162
  %1176 = vmatprep.subr.bf16.mxu0 0
  %1177 = vmatpush1.bf16.msra.mxu0 %v1163
  %1178 = vmatprep.subr.bf16.mxu0 0
  %1179 = vmatpush1.bf16.msra.mxu0 %v1164
  %1180 = vmatprep.subr.bf16.mxu0 0
  %1181 = vmatpush1.bf16.msra.mxu0 0
  %1182 = vmatprep.subr.bf16.mxu0 0
  %1183 = vmatpush1.bf16.msra.mxu0 0
  %1184 = vmatprep.subr.bf16.mxu0 0
  %1185 = vmatpush1.bf16.msra.mxu0 0
  %1186 = vmatprep.subr.bf16.mxu0 0
  %1187 = vmatpush1.bf16.msra.mxu0 0
  %1188 = vmatprep.subr.bf16.mxu0 0
  %1189 = vmatpush1.bf16.msra.mxu0 0
  %1190 = vmatprep.subr.bf16.mxu0 0
  %1191 = vmatpush1.bf16.msra.mxu0 0
  %1192 = vmatprep.subr.bf16.mxu0 0
  %1193 = vmatpush1.bf16.msra.mxu0 0
  %1194 = vmatprep.subr.bf16.mxu0 0
  %1195 = vmatpush1.bf16.msra.mxu0 0
  %1196 = vmatprep.subr.bf16.mxu0 0
  %1197 = vmatpush1.bf16.msra.mxu0 0
  %1198 = vmatprep.subr.bf16.mxu0 0
  %1199 = vmatpush1.bf16.msra.mxu0 0
  %1200 = vmatprep.subr.bf16.mxu0 0
  %1201 = vmatpush1.bf16.msra.mxu0 0
  %1202 = vmatprep.subr.bf16.mxu0 0
  %1203 = vmatpush1.bf16.msra.mxu0 0
  %1204 = vmatprep.mubr.bf16.mxu0 0
  %1205 = vmatmul.mubr.bf16.gmra.mrb[0].mxu0 %v1170
  %v1206 = vpop.f32.mrb[0].mxu0
  %v1207 = vadd.f32 0.0, %v1206
  %v1208 = vpop.f32.mrb[0].mxu0
  %v1209 = vpop.f32.mrb[0].mxu0
  %v1210 = vpop.f32.mrb[0].mxu0
  %1211 = vdwg.mxu0
  %v1212 = vadd.f32 %v1133, %v1207
  %s1213 = scalar_lea.vmem [#allocation2], 20
  %v1214 = vld [vmem:[%s1213] sm:$0xf]
  %s1215 = scalar_lea.vmem %s3, 160
  %v1216 = vld [vmem:[%s1215] sm:$0xf]
  %v1217 = vld [vmem:[%s1215 + $0x4] sm:$0xf]
  %v1218 = vld [vmem:[%s1215 + $0x8] sm:$0xf]
  %v1219 = vld [vmem:[%s1215 + $0xc] sm:$0xf]
  %v1220 = vld [vmem:[%s1215 + $0x10] sm:$0xf]
  %v1221 = vld [vmem:[%s1215 + $0x14] sm:$0xf]
  %v1222 = vld [vmem:[%s1215 + $0x18] sm:$0xf]
  %v1223 = vld [vmem:[%s1215 + $0x1c] sm:$0xf]
  %v1232 = vunpack.c.l.b16 %v1216
  %v1233 = vunpack.c.l.b16 %v1217
  %v1234 = vunpack.c.l.b16 %v1218
  %v1235 = vunpack.c.l.b16 %v1219
  %v1236 = vunpack.c.l.b16 %v1220
  %v1237 = vunpack.c.l.b16 %v1221
  %v1238 = vunpack.c.l.b16 %v1222
  %v1239 = vunpack.c.l.b16 %v1223
  %v1240 = vpack.c.b16 %v1233, %v1232
  %v1241 = vpack.c.b16 %v1235, %v1234
  %v1242 = vpack.c.b16 %v1237, %v1236
  %v1243 = vpack.c.b16 %v1239, %v1238
  %v1249 = vsel %vm865, %v1214, 0
  %1251 = vmatprep.subr.bf16.mxu0 0
  %1252 = vmatpush1.bf16.msra.mxu0 %v1240
  %1253 = vmatprep.subr.bf16.mxu0 0
  %1254 = vmatpush1.bf16.msra.mxu0 %v1241
  %1255 = vmatprep.subr.bf16.mxu0 0
  %1256 = vmatpush1.bf16.msra.mxu0 %v1242
  %1257 = vmatprep.subr.bf16.mxu0 0
  %1258 = vmatpush1.bf16.msra.mxu0 %v1243
  %1259 = vmatprep.subr.bf16.mxu0 0
  %1260 = vmatpush1.bf16.msra.mxu0 0
  %1261 = vmatprep.subr.bf16.mxu0 0
  %1262 = vmatpush1.bf16.msra.mxu0 0
  %1263 = vmatprep.subr.bf16.mxu0 0
  %1264 = vmatpush1.bf16.msra.mxu0 0
  %1265 = vmatprep.subr.bf16.mxu0 0
  %1266 = vmatpush1.bf16.msra.mxu0 0
  %1267 = vmatprep.subr.bf16.mxu0 0
  %1268 = vmatpush1.bf16.msra.mxu0 0
  %1269 = vmatprep.subr.bf16.mxu0 0
  %1270 = vmatpush1.bf16.msra.mxu0 0
  %1271 = vmatprep.subr.bf16.mxu0 0
  %1272 = vmatpush1.bf16.msra.mxu0 0
  %1273 = vmatprep.subr.bf16.mxu0 0
  %1274 = vmatpush1.bf16.msra.mxu0 0
  %1275 = vmatprep.subr.bf16.mxu0 0
  %1276 = vmatpush1.bf16.msra.mxu0 0
  %1277 = vmatprep.subr.bf16.mxu0 0
  %1278 = vmatpush1.bf16.msra.mxu0 0
  %1279 = vmatprep.subr.bf16.mxu0 0
  %1280 = vmatpush1.bf16.msra.mxu0 0
  %1281 = vmatprep.subr.bf16.mxu0 0
  %1282 = vmatpush1.bf16.msra.mxu0 0
  %1283 = vmatprep.mubr.bf16.mxu0 0
  %1284 = vmatmul.mubr.bf16.gmra.mrb[0].mxu0 %v1249
  %v1285 = vpop.f32.mrb[0].mxu0
  %v1286 = vadd.f32 0.0, %v1285
  %v1287 = vpop.f32.mrb[0].mxu0
  %v1288 = vpop.f32.mrb[0].mxu0
  %v1289 = vpop.f32.mrb[0].mxu0
  %1290 = vdwg.mxu0
  %v1291 = vadd.f32 %v1212, %v1286
  %s1292 = scalar_lea.vmem [#allocation2], 24
  %v1293 = vld [vmem:[%s1292] sm:$0xf]
  %s1294 = scalar_lea.vmem %s3, 192
  %v1295 = vld [vmem:[%s1294] sm:$0xf]
  %v1296 = vld [vmem:[%s1294 + $0x4] sm:$0xf]
  %v1297 = vld [vmem:[%s1294 + $0x8] sm:$0xf]
  %v1298 = vld [vmem:[%s1294 + $0xc] sm:$0xf]
  %v1299 = vld [vmem:[%s1294 + $0x10] sm:$0xf]
  %v1300 = vld [vmem:[%s1294 + $0x14] sm:$0xf]
  %v1301 = vld [vmem:[%s1294 + $0x18] sm:$0xf]
  %v1302 = vld [vmem:[%s1294 + $0x1c] sm:$0xf]
  %v1311 = vunpack.c.l.b16 %v1295
  %v1312 = vunpack.c.l.b16 %v1296
  %v1313 = vunpack.c.l.b16 %v1297
  %v1314 = vunpack.c.l.b16 %v1298
  %v1315 = vunpack.c.l.b16 %v1299
  %v1316 = vunpack.c.l.b16 %v1300
  %v1317 = vunpack.c.l.b16 %v1301
  %v1318 = vunpack.c.l.b16 %v1302
  %v1319 = vpack.c.b16 %v1312, %v1311
  %v1320 = vpack.c.b16 %v1314, %v1313
  %v1321 = vpack.c.b16 %v1316, %v1315
  %v1322 = vpack.c.b16 %v1318, %v1317
  %v1328 = vsel %vm865, %v1293, 0
  %1330 = vmatprep.subr.bf16.mxu0 0
  %1331 = vmatpush1.bf16.msra.mxu0 %v1319
  %1332 = vmatprep.subr.bf16.mxu0 0
  %1333 = vmatpush1.bf16.msra.mxu0 %v1320
  %1334 = vmatprep.subr.bf16.mxu0 0
  %1335 = vmatpush1.bf16.msra.mxu0 %v1321
  %1336 = vmatprep.subr.bf16.mxu0 0
  %1337 = vmatpush1.bf16.msra.mxu0 %v1322
  %1338 = vmatprep.subr.bf16.mxu0 0
  %1339 = vmatpush1.bf16.msra.mxu0 0
  %1340 = vmatprep.subr.bf16.mxu0 0
  %1341 = vmatpush1.bf16.msra.mxu0 0
  %1342 = vmatprep.subr.bf16.mxu0 0
  %1343 = vmatpush1.bf16.msra.mxu0 0
  %1344 = vmatprep.subr.bf16.mxu0 0
  %1345 = vmatpush1.bf16.msra.mxu0 0
  %1346 = vmatprep.subr.bf16.mxu0 0
  %1347 = vmatpush1.bf16.msra.mxu0 0
  %1348 = vmatprep.subr.bf16.mxu0 0
  %1349 = vmatpush1.bf16.msra.mxu0 0
  %1350 = vmatprep.subr.bf16.mxu0 0
  %1351 = vmatpush1.bf16.msra.mxu0 0
  %1352 = vmatprep.subr.bf16.mxu0 0
  %1353 = vmatpush1.bf16.msra.mxu0 0
  %1354 = vmatprep.subr.bf16.mxu0 0
  %1355 = vmatpush1.bf16.msra.mxu0 0
  %1356 = vmatprep.subr.bf16.mxu0 0
  %1357 = vmatpush1.bf16.msra.mxu0 0
  %1358 = vmatprep.subr.bf16.mxu0 0
  %1359 = vmatpush1.bf16.msra.mxu0 0
  %1360 = vmatprep.subr.bf16.mxu0 0
  %1361 = vmatpush1.bf16.msra.mxu0 0
  %1362 = vmatprep.mubr.bf16.mxu0 0
  %1363 = vmatmul.mubr.bf16.gmra.mrb[0].mxu0 %v1328
  %v1364 = vpop.f32.mrb[0].mxu0
  %v1365 = vadd.f32 0.0, %v1364
  %v1366 = vpop.f32.mrb[0].mxu0
  %v1367 = vpop.f32.mrb[0].mxu0
  %v1368 = vpop.f32.mrb[0].mxu0
  %1369 = vdwg.mxu0
  %v1370 = vadd.f32 %v1291, %v1365
  %s1371 = scalar_lea.vmem [#allocation2], 28
  %v1372 = vld [vmem:[%s1371] sm:$0xf]
  %s1373 = scalar_lea.vmem %s3, 224
  %v1374 = vld [vmem:[%s1373] sm:$0xf]
  %v1375 = vld [vmem:[%s1373 + $0x4] sm:$0xf]
  %v1376 = vld [vmem:[%s1373 + $0x8] sm:$0xf]
  %v1377 = vld [vmem:[%s1373 + $0xc] sm:$0xf]
  %v1378 = vld [vmem:[%s1373 + $0x10] sm:$0xf]
  %v1379 = vld [vmem:[%s1373 + $0x14] sm:$0xf]
  %v1380 = vld [vmem:[%s1373 + $0x18] sm:$0xf]
  %v1381 = vld [vmem:[%s1373 + $0x1c] sm:$0xf]
  %v1390 = vunpack.c.l.b16 %v1374
  %v1391 = vunpack.c.l.b16 %v1375
  %v1392 = vunpack.c.l.b16 %v1376
  %v1393 = vunpack.c.l.b16 %v1377
  %v1394 = vunpack.c.l.b16 %v1378
  %v1395 = vunpack.c.l.b16 %v1379
  %v1396 = vunpack.c.l.b16 %v1380
  %v1397 = vunpack.c.l.b16 %v1381
  %v1398 = vpack.c.b16 %v1391, %v1390
  %v1399 = vpack.c.b16 %v1393, %v1392
  %v1400 = vpack.c.b16 %v1395, %v1394
  %v1401 = vpack.c.b16 %v1397, %v1396
  %v1407 = vsel %vm865, %v1372, 0
  %1409 = vmatprep.subr.bf16.mxu0 0
  %1410 = vmatpush1.bf16.msra.mxu0 %v1398
  %1411 = vmatprep.subr.bf16.mxu0 0
  %1412 = vmatpush1.bf16.msra.mxu0 %v1399
  %1413 = vmatprep.subr.bf16.mxu0 0
  %1414 = vmatpush1.bf16.msra.mxu0 %v1400
  %1415 = vmatprep.subr.bf16.mxu0 0
  %1416 = vmatpush1.bf16.msra.mxu0 %v1401
  %1417 = vmatprep.subr.bf16.mxu0 0
  %1418 = vmatpush1.bf16.msra.mxu0 0
  %1419 = vmatprep.subr.bf16.mxu0 0
  %1420 = vmatpush1.bf16.msra.mxu0 0
  %1421 = vmatprep.subr.bf16.mxu0 0
  %1422 = vmatpush1.bf16.msra.mxu0 0
  %1423 = vmatprep.subr.bf16.mxu0 0
  %1424 = vmatpush1.bf16.msra.mxu0 0
  %1425 = vmatprep.subr.bf16.mxu0 0
  %1426 = vmatpush1.bf16.msra.mxu0 0
  %1427 = vmatprep.subr.bf16.mxu0 0
  %1428 = vmatpush1.bf16.msra.mxu0 0
  %1429 = vmatprep.subr.bf16.mxu0 0
  %1430 = vmatpush1.bf16.msra.mxu0 0
  %1431 = vmatprep.subr.bf16.mxu0 0
  %1432 = vmatpush1.bf16.msra.mxu0 0
  %1433 = vmatprep.subr.bf16.mxu0 0
  %1434 = vmatpush1.bf16.msra.mxu0 0
  %1435 = vmatprep.subr.bf16.mxu0 0
  %1436 = vmatpush1.bf16.msra.mxu0 0
  %1437 = vmatprep.subr.bf16.mxu0 0
  %1438 = vmatpush1.bf16.msra.mxu0 0
  %1439 = vmatprep.subr.bf16.mxu0 0
  %1440 = vmatpush1.bf16.msra.mxu0 0
  %1441 = vmatprep.mubr.bf16.mxu0 0
  %1442 = vmatmul.mubr.bf16.gmra.mrb[0].mxu0 %v1407
  %v1443 = vpop.f32.mrb[0].mxu0
  %v1444 = vadd.f32 0.0, %v1443
  %v1445 = vpop.f32.mrb[0].mxu0
  %v1446 = vpop.f32.mrb[0].mxu0
  %v1447 = vpop.f32.mrb[0].mxu0
  %1448 = vdwg.mxu0
  %v1449 = vadd.f32 %v1370, %v1444
  %s1450 = scalar_lea.vmem [#allocation2], 32
  %v1451 = vld [vmem:[%s1450] sm:$0xf]
  %s1452 = scalar_lea.vmem %s3, 256
  %v1453 = vld [vmem:[%s1452] sm:$0xf]
  %v1454 = vld [vmem:[%s1452 + $0x4] sm:$0xf]
  %v1455 = vld [vmem:[%s1452 + $0x8] sm:$0xf]
  %v1456 = vld [vmem:[%s1452 + $0xc] sm:$0xf]
  %v1457 = vld [vmem:[%s1452 + $0x10] sm:$0xf]
  %v1458 = vld [vmem:[%s1452 + $0x14] sm:$0xf]
  %v1459 = vld [vmem:[%s1452 + $0x18] sm:$0xf]
  %v1460 = vld [vmem:[%s1452 + $0x1c] sm:$0xf]
  %v1469 = vunpack.c.l.b16 %v1453
  %v1470 = vunpack.c.l.b16 %v1454
  %v1471 = vunpack.c.l.b16 %v1455
  %v1472 = vunpack.c.l.b16 %v1456
  %v1473 = vunpack.c.l.b16 %v1457
  %v1474 = vunpack.c.l.b16 %v1458
  %v1475 = vunpack.c.l.b16 %v1459
  %v1476 = vunpack.c.l.b16 %v1460
  %v1477 = vpack.c.b16 %v1470, %v1469
  %v1478 = vpack.c.b16 %v1472, %v1471
  %v1479 = vpack.c.b16 %v1474, %v1473
  %v1480 = vpack.c.b16 %v1476, %v1475
  %v1486 = vsel %vm865, %v1451, 0
  %1488 = vmatprep.subr.bf16.mxu0 0
  %1489 = vmatpush1.bf16.msra.mxu0 %v1477
  %1490 = vmatprep.subr.bf16.mxu0 0
  %1491 = vmatpush1.bf16.msra.mxu0 %v1478
  %1492 = vmatprep.subr.bf16.mxu0 0
  %1493 = vmatpush1.bf16.msra.mxu0 %v1479
  %1494 = vmatprep.subr.bf16.mxu0 0
  %1495 = vmatpush1.bf16.msra.mxu0 %v1480
  %1496 = vmatprep.subr.bf16.mxu0 0
  %1497 = vmatpush1.bf16.msra.mxu0 0
  %1498 = vmatprep.subr.bf16.mxu0 0
  %1499 = vmatpush1.bf16.msra.mxu0 0
  %1500 = vmatprep.subr.bf16.mxu0 0
  %1501 = vmatpush1.bf16.msra.mxu0 0
  %1502 = vmatprep.subr.bf16.mxu0 0
  %1503 = vmatpush1.bf16.msra.mxu0 0
  %1504 = vmatprep.subr.bf16.mxu0 0
  %1505 = vmatpush1.bf16.msra.mxu0 0
  %1506 = vmatprep.subr.bf16.mxu0 0
  %1507 = vmatpush1.bf16.msra.mxu0 0
  %1508 = vmatprep.subr.bf16.mxu0 0
  %1509 = vmatpush1.bf16.msra.mxu0 0
  %1510 = vmatprep.subr.bf16.mxu0 0
  %1511 = vmatpush1.bf16.msra.mxu0 0
  %1512 = vmatprep.subr.bf16.mxu0 0
  %1513 = vmatpush1.bf16.msra.mxu0 0
  %1514 = vmatprep.subr.bf16.mxu0 0
  %1515 = vmatpush1.bf16.msra.mxu0 0
  %1516 = vmatprep.subr.bf16.mxu0 0
  %1517 = vmatpush1.bf16.msra.mxu0 0
  %1518 = vmatprep.subr.bf16.mxu0 0
  %1519 = vmatpush1.bf16.msra.mxu0 0
  %1520 = vmatprep.mubr.bf16.mxu0 0
  %1521 = vmatmul.mubr.bf16.gmra.mrb[0].mxu0 %v1486
  %v1522 = vpop.f32.mrb[0].mxu0
  %v1523 = vadd.f32 0.0, %v1522
  %v1524 = vpop.f32.mrb[0].mxu0
  %v1525 = vpop.f32.mrb[0].mxu0
  %v1526 = vpop.f32.mrb[0].mxu0
  %1527 = vdwg.mxu0
  %v1528 = vadd.f32 %v1449, %v1523
  %v1529 = vld [vmem:[%s4] sm:$0x1]
  %v1531 = vlaneseq
  %v1532 = vshrl.u32 %v1531, 7
  %v1533 = vsub.s32 0, %v1532
  %v1534 = vrot.slane %v1529, %v1533
  %v1536 = vadd.f32 %v1528, %v1534
  %v1537 = vmax.f32 %v1536, 0.0
  %v1538 = vpack.c.bf16 %v1537, %v1537
  %1539 = vst.msk [vmem:[#allocation3] sm:$0xf] %vm811, %v1538
  %v1540 = vld [vmem:[#allocation3] sm:$0xf]
  %v1541 = vld [vmem:[%s5] sm:$0xff]
  %v1542 = vld [vmem:[%s5 + $0x8] sm:$0xff]
  %v1543 = vld [vmem:[%s5 + $0x10] sm:$0xff]
  %v1544 = vld [vmem:[%s5 + $0x18] sm:$0xff]
  %v1545 = vld [vmem:[%s5 + $0x20] sm:$0xff]
  %v1546 = vld [vmem:[%s5 + $0x28] sm:$0xff]
  %v1547 = vld [vmem:[%s5 + $0x30] sm:$0xff]
  %v1548 = vld [vmem:[%s5 + $0x38] sm:$0xff]
  %v1549 = vld [vmem:[%s5 + $0x40] sm:$0xff]
  %v1550 = vld [vmem:[%s5 + $0x48] sm:$0xff]
  %v1551 = vld [vmem:[%s5 + $0x50] sm:$0xff]
  %v1552 = vld [vmem:[%s5 + $0x58] sm:$0xff]
  %v1553 = vld [vmem:[%s5 + $0x60] sm:$0xff]
  %v1554 = vld [vmem:[%s5 + $0x68] sm:$0xff]
  %v1555 = vld [vmem:[%s5 + $0x70] sm:$0xff]
  %v1556 = vld [vmem:[%s5 + $0x78] sm:$0xff]
  %v1557 = vld [vmem:[%s6] sm:$0xf]
  %v1559 = vlaneseq
  %v1560 = vshrl.u32 %v1559, 7
  %v1561 = vsub.s32 0, %v1560
  %v1562 = vrot.slane %v1557, %v1561
  %v1563 = vlaneseq
  %v1564 = vshrl.u32 %v1563, 7
  %v1565 = vsub.s32 1, %v1564
  %v1566 = vrot.slane %v1557, %v1565
  %v1567 = vlaneseq
  %v1568 = vshrl.u32 %v1567, 7
  %v1569 = vsub.s32 2, %v1568
  %v1570 = vrot.slane %v1557, %v1569
  %v1571 = vlaneseq
  %v1572 = vshrl.u32 %v1571, 7
  %v1573 = vsub.s32 3, %v1572
  %v1574 = vrot.slane %v1557, %v1573
  %v1595 = vunpack.c.l.b16 %v1541
  %v1596 = vunpack.c.h.b16 %v1541
  %v1597 = vunpack.c.l.b16 %v1542
  %v1598 = vunpack.c.h.b16 %v1542
  %v1599 = vunpack.c.l.b16 %v1543
  %v1600 = vunpack.c.h.b16 %v1543
  %v1601 = vunpack.c.l.b16 %v1544
  %v1602 = vunpack.c.h.b16 %v1544
  %v1603 = vunpack.c.l.b16 %v1545
  %v1604 = vunpack.c.h.b16 %v1545
  %v1605 = vunpack.c.l.b16 %v1546
  %v1606 = vunpack.c.h.b16 %v1546
  %v1607 = vunpack.c.l.b16 %v1547
  %v1608 = vunpack.c.h.b16 %v1547
  %v1609 = vunpack.c.l.b16 %v1548
  %v1610 = vunpack.c.h.b16 %v1548
  %v1611 = vunpack.c.l.b16 %v1549
  %v1612 = vunpack.c.h.b16 %v1549
  %v1613 = vunpack.c.l.b16 %v1550
  %v1614 = vunpack.c.h.b16 %v1550
  %v1615 = vunpack.c.l.b16 %v1551
  %v1616 = vunpack.c.h.b16 %v1551
  %v1617 = vunpack.c.l.b16 %v1552
  %v1618 = vunpack.c.h.b16 %v1552
  %v1619 = vunpack.c.l.b16 %v1553
  %v1620 = vunpack.c.h.b16 %v1553
  %v1621 = vunpack.c.l.b16 %v1554
  %v1622 = vunpack.c.h.b16 %v1554
  %v1623 = vunpack.c.l.b16 %v1555
  %v1624 = vunpack.c.h.b16 %v1555
  %v1625 = vunpack.c.l.b16 %v1556
  %v1626 = vunpack.c.h.b16 %v1556
  %v1627 = vpack.c.b16 %v1599, %v1595
  %v1628 = vpack.c.b16 %v1600, %v1596
  %v1629 = vpack.c.b16 %v1601, %v1597
  %v1630 = vpack.c.b16 %v1602, %v1598
  %v1631 = vpack.c.b16 %v1607, %v1603
  %v1632 = vpack.c.b16 %v1608, %v1604
  %v1633 = vpack.c.b16 %v1609, %v1605
  %v1634 = vpack.c.b16 %v1610, %v1606
  %v1635 = vpack.c.b16 %v1615, %v1611
  %v1636 = vpack.c.b16 %v1616, %v1612
  %v1637 = vpack.c.b16 %v1617, %v1613
  %v1638 = vpack.c.b16 %v1618, %v1614
  %v1639 = vpack.c.b16 %v1623, %v1619
  %v1640 = vpack.c.b16 %v1624, %v1620
  %v1641 = vpack.c.b16 %v1625, %v1621
  %v1642 = vpack.c.b16 %v1626, %v1622
  %v1660 = vsel %vm865, %v1540, 0
  %1662 = vmatprep.subr.bf16.mxu0 %v1628
  %1663 = vmatpush1.bf16.msra.mxu0 %v1627
  %1664 = vmatprep.subr.bf16.mxu0 %v1632
  %1665 = vmatpush1.bf16.msra.mxu0 %v1631
  %1666 = vmatprep.subr.bf16.mxu0 %v1636
  %1667 = vmatpush1.bf16.msra.mxu0 %v1635
  %1668 = vmatprep.subr.bf16.mxu0 %v1640
  %1669 = vmatpush1.bf16.msra.mxu0 %v1639
  %1670 = vmatprep.subr.bf16.mxu0 0
  %1671 = vmatpush1.bf16.msra.mxu0 0
  %1672 = vmatprep.subr.bf16.mxu0 0
  %1673 = vmatpush1.bf16.msra.mxu0 0
  %1674 = vmatprep.subr.bf16.mxu0 0
  %1675 = vmatpush1.bf16.msra.mxu0 0
  %1676 = vmatprep.subr.bf16.mxu0 0
  %1677 = vmatpush1.bf16.msra.mxu0 0
  %1678 = vmatprep.subr.bf16.mxu0 0
  %1679 = vmatpush1.bf16.msra.mxu0 0
  %1680 = vmatprep.subr.bf16.mxu0 0
  %1681 = vmatpush1.bf16.msra.mxu0 0
  %1682 = vmatprep.subr.bf16.mxu0 0
  %1683 = vmatpush1.bf16.msra.mxu0 0
  %1684 = vmatprep.subr.bf16.mxu0 0
  %1685 = vmatpush1.bf16.msra.mxu0 0
  %1686 = vmatprep.subr.bf16.mxu0 0
  %1687 = vmatpush1.bf16.msra.mxu0 0
  %1688 = vmatprep.subr.bf16.mxu0 0
  %1689 = vmatpush1.bf16.msra.mxu0 0
  %1690 = vmatprep.subr.bf16.mxu0 0
  %1691 = vmatpush1.bf16.msra.mxu0 0
  %1692 = vmatprep.subr.bf16.mxu0 0
  %1693 = vmatpush1.bf16.msra.mxu0 0
  %1694 = vmatprep.mubr.bf16.mxu0 0
  %1695 = vmatmul.mubr.bf16.gmra.mrb[0].mxu0 %v1660
  %v1696 = vpop.f32.mrb[0].mxu0
  %v1697 = vadd.f32 %v1562, %v1696
  %v1698 = vpop.f32.mrb[0].mxu0
  %v1699 = vadd.f32 %v1566, %v1698
  %v1700 = vpop.f32.mrb[0].mxu0
  %v1701 = vpop.f32.mrb[0].mxu0
  %1702 = vdwg.mxu0
  %1703 = vmatprep.subr.bf16.mxu0 %v1630
  %1704 = vmatpush1.bf16.msra.mxu0 %v1629
  %1705 = vmatprep.subr.bf16.mxu0 %v1634
  %1706 = vmatpush1.bf16.msra.mxu0 %v1633
  %1707 = vmatprep.subr.bf16.mxu0 %v1638
  %1708 = vmatpush1.bf16.msra.mxu0 %v1637
  %1709 = vmatprep.subr.bf16.mxu0 %v1642
  %1710 = vmatpush1.bf16.msra.mxu0 %v1641
  %1711 = vmatprep.subr.bf16.mxu0 0
  %1712 = vmatpush1.bf16.msra.mxu0 0
  %1713 = vmatprep.subr.bf16.mxu0 0
  %1714 = vmatpush1.bf16.msra.mxu0 0
  %1715 = vmatprep.subr.bf16.mxu0 0
  %1716 = vmatpush1.bf16.msra.mxu0 0
  %1717 = vmatprep.subr.bf16.mxu0 0
  %1718 = vmatpush1.bf16.msra.mxu0 0
  %1719 = vmatprep.subr.bf16.mxu0 0
  %1720 = vmatpush1.bf16.msra.mxu0 0
  %1721 = vmatprep.subr.bf16.mxu0 0
  %1722 = vmatpush1.bf16.msra.mxu0 0
  %1723 = vmatprep.subr.bf16.mxu0 0
  %1724 = vmatpush1.bf16.msra.mxu0 0
  %1725 = vmatprep.subr.bf16.mxu0 0
  %1726 = vmatpush1.bf16.msra.mxu0 0
  %1727 = vmatprep.subr.bf16.mxu0 0
  %1728 = vmatpush1.bf16.msra.mxu0 0
  %1729 = vmatprep.subr.bf16.mxu0 0
  %1730 = vmatpush1.bf16.msra.mxu0 0
  %1731 = vmatprep.subr.bf16.mxu0 0
  %1732 = vmatpush1.bf16.msra.mxu0 0
  %1733 = vmatprep.subr.bf16.mxu0 0
  %1734 = vmatpush1.bf16.msra.mxu0 0
  %1735 = vmatprep.mubr.bf16.mxu0 0
  %1736 = vmatmul.mubr.bf16.gmra.mrb[0].mxu0 %v1660
  %v1737 = vpop.f32.mrb[0].mxu0
  %v1738 = vadd.f32 %v1570, %v1737
  %v1739 = vpop.f32.mrb[0].mxu0
  %v1740 = vadd.f32 %v1574, %v1739
  %v1741 = vpop.f32.mrb[0].mxu0
  %v1742 = vpop.f32.mrb[0].mxu0
  %1743 = vdwg.mxu0
  %v1744 = vmax.f32 %v1697, 0.0
  %v1745 = vmax.f32 %v1699, 0.0
  %v1746 = vmax.f32 %v1738, 0.0
  %v1747 = vmax.f32 %v1740, 0.0
  %v1748 = vld [vmem:[%s7] sm:$0xff]
  %v1749 = vld [vmem:[%s7 + $0x8] sm:$0xff]
  %v1750 = vld [vmem:[%s7 + $0x10] sm:$0xff]
  %v1751 = vld [vmem:[%s7 + $0x18] sm:$0xff]
  %v1752 = vld [vmem:[%s7 + $0x20] sm:$0xff]
  %v1753 = vld [vmem:[%s7 + $0x28] sm:$0xff]
  %v1754 = vld [vmem:[%s7 + $0x30] sm:$0xff]
  %v1755 = vld [vmem:[%s7 + $0x38] sm:$0xff]
  %v1756 = vld [vmem:[%s7 + $0x40] sm:$0xff]
  %v1757 = vld [vmem:[%s7 + $0x48] sm:$0xff]
  %v1758 = vld [vmem:[%s7 + $0x50] sm:$0xff]
  %v1759 = vld [vmem:[%s7 + $0x58] sm:$0xff]
  %v1760 = vld [vmem:[%s7 + $0x60] sm:$0xff]
  %v1761 = vld [vmem:[%s7 + $0x68] sm:$0xff]
  %v1762 = vld [vmem:[%s7 + $0x70] sm:$0xff]
  %v1763 = vld [vmem:[%s7 + $0x78] sm:$0xff]
  %v1764 = vld [vmem:[%s7 + $0x80] sm:$0xff]
  %v1765 = vld [vmem:[%s7 + $0x88] sm:$0xff]
  %v1766 = vld [vmem:[%s7 + $0x90] sm:$0xff]
  %v1767 = vld [vmem:[%s7 + $0x98] sm:$0xff]
  %v1768 = vld [vmem:[%s7 + $0xa0] sm:$0xff]
  %v1769 = vld [vmem:[%s7 + $0xa8] sm:$0xff]
  %v1770 = vld [vmem:[%s7 + $0xb0] sm:$0xff]
  %v1771 = vld [vmem:[%s7 + $0xb8] sm:$0xff]
  %v1772 = vld [vmem:[%s7 + $0xc0] sm:$0xff]
  %v1773 = vld [vmem:[%s7 + $0xc8] sm:$0xff]
  %v1774 = vld [vmem:[%s7 + $0xd0] sm:$0xff]
  %v1775 = vld [vmem:[%s7 + $0xd8] sm:$0xff]
  %v1776 = vld [vmem:[%s7 + $0xe0] sm:$0xff]
  %v1777 = vld [vmem:[%s7 + $0xe8] sm:$0xff]
  %v1778 = vld [vmem:[%s7 + $0xf0] sm:$0xff]
  %v1779 = vld [vmem:[%s7 + $0xf8] sm:$0xff]
  %v1780 = vld [vmem:[%s7 + $0x100] sm:$0xff]
  %v1781 = vld [vmem:[%s7 + $0x108] sm:$0xff]
  %v1782 = vld [vmem:[%s7 + $0x110] sm:$0xff]
  %v1783 = vld [vmem:[%s7 + $0x118] sm:$0xff]
  %v1784 = vld [vmem:[%s7 + $0x120] sm:$0xff]
  %v1785 = vld [vmem:[%s7 + $0x128] sm:$0xff]
  %v1786 = vld [vmem:[%s7 + $0x130] sm:$0xff]
  %v1787 = vld [vmem:[%s7 + $0x138] sm:$0xff]
  %v1788 = vld [vmem:[%s7 + $0x140] sm:$0xff]
  %v1789 = vld [vmem:[%s7 + $0x148] sm:$0xff]
  %v1790 = vld [vmem:[%s7 + $0x150] sm:$0xff]
  %v1791 = vld [vmem:[%s7 + $0x158] sm:$0xff]
  %v1792 = vld [vmem:[%s7 + $0x160] sm:$0xff]
  %v1793 = vld [vmem:[%s7 + $0x168] sm:$0xff]
  %v1794 = vld [vmem:[%s7 + $0x170] sm:$0xff]
  %v1795 = vld [vmem:[%s7 + $0x178] sm:$0xff]
  %v1796 = vld [vmem:[%s7 + $0x180] sm:$0xff]
  %v1797 = vld [vmem:[%s7 + $0x188] sm:$0xff]
  %v1798 = vld [vmem:[%s7 + $0x190] sm:$0xff]
  %v1799 = vld [vmem:[%s7 + $0x198] sm:$0xff]
  %v1800 = vld [vmem:[%s7 + $0x1a0] sm:$0xff]
  %v1801 = vld [vmem:[%s7 + $0x1a8] sm:$0xff]
  %v1802 = vld [vmem:[%s7 + $0x1b0] sm:$0xff]
  %v1803 = vld [vmem:[%s7 + $0x1b8] sm:$0xff]
  %v1804 = vld [vmem:[%s7 + $0x1c0] sm:$0xff]
  %v1805 = vld [vmem:[%s7 + $0x1c8] sm:$0xff]
  %v1806 = vld [vmem:[%s7 + $0x1d0] sm:$0xff]
  %v1807 = vld [vmem:[%s7 + $0x1d8] sm:$0xff]
  %v1808 = vld [vmem:[%s7 + $0x1e0] sm:$0xff]
  %v1809 = vld [vmem:[%s7 + $0x1e8] sm:$0xff]
  %v1810 = vld [vmem:[%s7 + $0x1f0] sm:$0xff]
  %v1811 = vld [vmem:[%s7 + $0x1f8] sm:$0xff]
  %v1812 = vld [vmem:[%s8] sm:$0x1]
  %v1814 = vlaneseq
  %v1815 = vshrl.u32 %v1814, 7
  %v1816 = vsub.s32 0, %v1815
  %v1817 = vrot.slane %v1812, %v1816
  %1819 = vmatprep.subr.mxu0 0.0
  %1820 = vmatpush1.msra.mxu0 %v1748
  %1821 = vmatprep.subr.mxu0 0.0
  %1822 = vmatpush1.msra.mxu0 %v1749
  %1823 = vmatprep.subr.mxu0 0.0
  %1824 = vmatpush1.msra.mxu0 %v1750
  %1825 = vmatprep.subr.mxu0 0.0
  %1826 = vmatpush1.msra.mxu0 %v1751
  %1827 = vmatprep.subr.mxu0 0.0
  %1828 = vmatpush1.msra.mxu0 %v1752
  %1829 = vmatprep.subr.mxu0 0.0
  %1830 = vmatpush1.msra.mxu0 %v1753
  %1831 = vmatprep.subr.mxu0 0.0
  %1832 = vmatpush1.msra.mxu0 %v1754
  %1833 = vmatprep.subr.mxu0 0.0
  %1834 = vmatpush1.msra.mxu0 %v1755
  %1835 = vmatprep.subr.mxu0 0.0
  %1836 = vmatpush1.msra.mxu0 %v1756
  %1837 = vmatprep.subr.mxu0 0.0
  %1838 = vmatpush1.msra.mxu0 %v1757
  %1839 = vmatprep.subr.mxu0 0.0
  %1840 = vmatpush1.msra.mxu0 %v1758
  %1841 = vmatprep.subr.mxu0 0.0
  %1842 = vmatpush1.msra.mxu0 %v1759
  %1843 = vmatprep.subr.mxu0 0.0
  %1844 = vmatpush1.msra.mxu0 %v1760
  %1845 = vmatprep.subr.mxu0 0.0
  %1846 = vmatpush1.msra.mxu0 %v1761
  %1847 = vmatprep.subr.mxu0 0.0
  %1848 = vmatpush1.msra.mxu0 %v1762
  %1849 = vmatprep.subr.mxu0 0.0
  %1850 = vmatpush1.msra.mxu0 %v1763
  %1851 = vmatprep.subr.mxu0 0.0
  %1852 = vmatpush1.msra.mxu0 %v1764
  %1853 = vmatprep.subr.mxu0 0.0
  %1854 = vmatpush1.msra.mxu0 %v1765
  %1855 = vmatprep.subr.mxu0 0.0
  %1856 = vmatpush1.msra.mxu0 %v1766
  %1857 = vmatprep.subr.mxu0 0.0
  %1858 = vmatpush1.msra.mxu0 %v1767
  %1859 = vmatprep.subr.mxu0 0.0
  %1860 = vmatpush1.msra.mxu0 %v1768
  %1861 = vmatprep.subr.mxu0 0.0
  %1862 = vmatpush1.msra.mxu0 %v1769
  %1863 = vmatprep.subr.mxu0 0.0
  %1864 = vmatpush1.msra.mxu0 %v1770
  %1865 = vmatprep.subr.mxu0 0.0
  %1866 = vmatpush1.msra.mxu0 %v1771
  %1867 = vmatprep.subr.mxu0 0.0
  %1868 = vmatpush1.msra.mxu0 %v1772
  %1869 = vmatprep.subr.mxu0 0.0
  %1870 = vmatpush1.msra.mxu0 %v1773
  %1871 = vmatprep.subr.mxu0 0.0
  %1872 = vmatpush1.msra.mxu0 %v1774
  %1873 = vmatprep.subr.mxu0 0.0
  %1874 = vmatpush1.msra.mxu0 %v1775
  %1875 = vmatprep.subr.mxu0 0.0
  %1876 = vmatpush1.msra.mxu0 %v1776
  %1877 = vmatprep.subr.mxu0 0.0
  %1878 = vmatpush1.msra.mxu0 %v1777
  %1879 = vmatprep.subr.mxu0 0.0
  %1880 = vmatpush1.msra.mxu0 %v1778
  %1881 = vmatprep.subr.mxu0 0.0
  %1882 = vmatpush1.msra.mxu0 %v1779
  %1883 = vmatprep.mubr.f32.mxu0 %v1745
  %1884 = vmatmul.mubr.f32.gmra.mrb[0].mxu0 %v1744
  %v1885 = vpop.f32.mrb[0].mxu0
  %v1886 = vadd.f32 %v1817, %v1885
  %v1887 = vpop.f32.mrb[0].mxu0
  %1888 = vdwg.mxu0
  %1889 = vmatprep.subr.mxu0 0.0
  %1890 = vmatpush1.msra.mxu0 %v1780
  %1891 = vmatprep.subr.mxu0 0.0
  %1892 = vmatpush1.msra.mxu0 %v1781
  %1893 = vmatprep.subr.mxu0 0.0
  %1894 = vmatpush1.msra.mxu0 %v1782
  %1895 = vmatprep.subr.mxu0 0.0
  %1896 = vmatpush1.msra.mxu0 %v1783
  %1897 = vmatprep.subr.mxu0 0.0
  %1898 = vmatpush1.msra.mxu0 %v1784
  %1899 = vmatprep.subr.mxu0 0.0
  %1900 = vmatpush1.msra.mxu0 %v1785
  %1901 = vmatprep.subr.mxu0 0.0
  %1902 = vmatpush1.msra.mxu0 %v1786
  %1903 = vmatprep.subr.mxu0 0.0
  %1904 = vmatpush1.msra.mxu0 %v1787
  %1905 = vmatprep.subr.mxu0 0.0
  %1906 = vmatpush1.msra.mxu0 %v1788
  %1907 = vmatprep.subr.mxu0 0.0
  %1908 = vmatpush1.msra.mxu0 %v1789
  %1909 = vmatprep.subr.mxu0 0.0
  %1910 = vmatpush1.msra.mxu0 %v1790
  %1911 = vmatprep.subr.mxu0 0.0
  %1912 = vmatpush1.msra.mxu0 %v1791
  %1913 = vmatprep.subr.mxu0 0.0
  %1914 = vmatpush1.msra.mxu0 %v1792
  %1915 = vmatprep.subr.mxu0 0.0
  %1916 = vmatpush1.msra.mxu0 %v1793
  %1917 = vmatprep.subr.mxu0 0.0
  %1918 = vmatpush1.msra.mxu0 %v1794
  %1919 = vmatprep.subr.mxu0 0.0
  %1920 = vmatpush1.msra.mxu0 %v1795
  %1921 = vmatprep.subr.mxu0 0.0
  %1922 = vmatpush1.msra.mxu0 %v1796
  %1923 = vmatprep.subr.mxu0 0.0
  %1924 = vmatpush1.msra.mxu0 %v1797
  %1925 = vmatprep.subr.mxu0 0.0
  %1926 = vmatpush1.msra.mxu0 %v1798
  %1927 = vmatprep.subr.mxu0 0.0
  %1928 = vmatpush1.msra.mxu0 %v1799
  %1929 = vmatprep.subr.mxu0 0.0
  %1930 = vmatpush1.msra.mxu0 %v1800
  %1931 = vmatprep.subr.mxu0 0.0
  %1932 = vmatpush1.msra.mxu0 %v1801
  %1933 = vmatprep.subr.mxu0 0.0
  %1934 = vmatpush1.msra.mxu0 %v1802
  %1935 = vmatprep.subr.mxu0 0.0
  %1936 = vmatpush1.msra.mxu0 %v1803
  %1937 = vmatprep.subr.mxu0 0.0
  %1938 = vmatpush1.msra.mxu0 %v1804
  %1939 = vmatprep.subr.mxu0 0.0
  %1940 = vmatpush1.msra.mxu0 %v1805
  %1941 = vmatprep.subr.mxu0 0.0
  %1942 = vmatpush1.msra.mxu0 %v1806
  %1943 = vmatprep.subr.mxu0 0.0
  %1944 = vmatpush1.msra.mxu0 %v1807
  %1945 = vmatprep.subr.mxu0 0.0
  %1946 = vmatpush1.msra.mxu0 %v1808
  %1947 = vmatprep.subr.mxu0 0.0
  %1948 = vmatpush1.msra.mxu0 %v1809
  %1949 = vmatprep.subr.mxu0 0.0
  %1950 = vmatpush1.msra.mxu0 %v1810
  %1951 = vmatprep.subr.mxu0 0.0
  %1952 = vmatpush1.msra.mxu0 %v1811
  %1953 = vmatprep.mubr.f32.mxu0 %v1747
  %1954 = vmatmul.mubr.f32.gmra.mrb[0].mxu0 %v1746
  %v1955 = vpop.f32.mrb[0].mxu0
  %v1956 = vadd.f32 %v1886, %v1955
  %v1957 = vpop.f32.mrb[0].mxu0
  %1958 = vdwg.mxu0
  %1959 = vst [vmem:[%s9] sm:$0xff] %v1956
  // Predicated region
  $region38: #{dqn_forward.3} parent=0 // pred_check
    _
  $region39: #{dqn_forward.3} parent=0 // pred_check_branch
    %1961 = sbr.rel (0) target = $region41
  $region40: #{dqn_forward.3} parent=0 // pred_region
    _
  $region41: #{dqn_forward.3} parent=0 // pred_fallthru
    _
  // Predicated region
  $region42: #{dqn_forward.3} parent=0 // pred_check
    _
  $region43: #{dqn_forward.3} parent=0 // pred_check_branch
    %1963 = sbr.rel (0) target = $region45
  $region44: #{dqn_forward.3} parent=0 // pred_region
    _
  $region45: #{dqn_forward.3} parent=0 // pred_fallthru
    _

</llo_original>
